<compile_context>
chip_gen: v7x
topology: tpu7x:2x2x1
jax: 0.10.0
libtpu: 0.0.40
codegen_flags: <defaults>
</compile_context>

<pallas_src>
import math

import jax
import jax.numpy as jnp
from jax import lax
from jax.experimental import pallas as pl
from jax.experimental.pallas import tpu as pltpu


# ----------------------------- kernel helpers ------------------------------ #
def _layernorm(x, w, b, eps=1e-5):
    x = x.astype(jnp.float32)
    mu = jnp.mean(x, axis=-1, keepdims=True)
    var = jnp.mean((x - mu) ** 2, axis=-1, keepdims=True)
    return (x - mu) * lax.rsqrt(var + eps) * w + b


def _gelu(x):
    # exact (erf-based) GELU, matching torch.nn.functional.gelu's default.
    # TODO(synk): on v5e, if the VALU slot binds, switch to the tanh approximation
    # (runs on the EUP) -- changes numerics slightly vs torch's exact GELU.
    return 0.5 * x * (1.0 + lax.erf(x * (1.0 / math.sqrt(2.0))))


# -------------------- pass 1: K/V projection (grid over B) ------------------ #
def kv_proj_kernel(kv_ref, ln_w_ref, ln_b_ref,
                   kvfc_w_ref, kvfc_b_ref,
                   kpjT_w_ref, kpjT_b_ref, vpjT_w_ref, vpjT_b_ref,
                   kT_ref, vT_ref):
    bf16 = jnp.bfloat16
    n_head = kpjT_w_ref.shape[0]
    H = kvfc_w_ref.shape[1] // 2

    kvn = _layernorm(kv_ref[0], ln_w_ref[1], ln_b_ref[1])              # (Tk, C) f32
    # fused first Linear of the k- and v-projection MLPs: (Tk, C) @ (C, 2H)
    hkv = jnp.dot(kvn.astype(bf16), kvfc_w_ref[...],
                  preferred_element_type=jnp.float32) + kvfc_b_ref[...]
    hkv = _gelu(hkv).astype(bf16)                                       # (Tk, 2H)
    hk = hkv[:, :H]            # lane-aligned slices (wrapper asserts H % 128 == 0)
    hv = hkv[:, H:]

    # Per-head second Linear, written directly in the lane-dense transposed
    # (Dh, Tk) layout that the attention kernel consumes.  Static unroll over
    # heads with plain 2-D MXU matmuls (no broadcasts, no exotic dot_generals).
    for h in range(n_head):
        kT = lax.dot_general(kpjT_w_ref[h], hk, (((1,), (1,)), ((), ())),
                             preferred_element_type=jnp.float32) + kpjT_b_ref[h]
        vT = lax.dot_general(vpjT_w_ref[h], hv, (((1,), (1,)), ((), ())),
                             preferred_element_type=jnp.float32) + vpjT_b_ref[h]
        kT_ref[0, h] = kT.astype(kT_ref.dtype)                          # (Dh, Tk)
        vT_ref[0, h] = vT.astype(vT_ref.dtype)


# ------------- pass 2: q path + attention + MLP (grid over B, q-tiles) ------ #
def block_attn_kernel(q_ref, kT_ref, vT_ref,
                      ln_w_ref, ln_b_ref,
                      qfc_w_ref, qfc_b_ref, qpj_w_ref, qpj_b_ref,
                      aout_w_ref, aout_b_ref,
                      mfc_w_ref, mfc_b_ref, mpj_w_ref, mpj_b_ref,
                      o_ref):
    bf16 = jnp.bfloat16
    n_head = qpj_w_ref.shape[0]
    Tq = q_ref.shape[1]
    C = q_ref.shape[2]

    # ---- q path: LN -> 2-layer GELU MLP.  1/sqrt(Dh) is folded into
    #      qpj_w / qpj_b by the wrapper. ----
    qn = _layernorm(q_ref[0], ln_w_ref[0], ln_b_ref[0])                 # (Tq, C) f32
    hq = jnp.dot(qn.astype(bf16), qfc_w_ref[...],
                 preferred_element_type=jnp.float32) + qfc_b_ref[...]
    hq = _gelu(hq).astype(bf16)                                         # (Tq, H)

    # ---- multi-head attention (no mask; dropout = identity in eval mode).
    #      Heads statically unrolled; per-head output projections accumulate
    #      directly into one (Tq, C) f32 buffer (fused head reduction). ----
    y_out = jnp.zeros((Tq, C), jnp.float32)
    for h in range(n_head):
        qh = jnp.dot(hq, qpj_w_ref[h],
                     preferred_element_type=jnp.float32) + qpj_b_ref[h]   # (Tq, Dh)
        # scores: K cached pre-transposed (Dh, Tk) -> lane-dense on Tk
        s = jnp.dot(qh.astype(bf16), kT_ref[0, h],
                    preferred_element_type=jnp.float32)                   # (Tq, Tk)
        s = s - jnp.max(s, axis=-1, keepdims=True)
        p = jnp.exp(s)
        p = p * pl.reciprocal(jnp.sum(p, axis=-1, keepdims=True), approx=True)
        # weighted sum over keys: V cached as (Dh, Tk) -> contract over Tk
        y = lax.dot_general(p.astype(bf16), vT_ref[0, h],
                            (((1,), (1,)), ((), ())),
                            preferred_element_type=jnp.float32)           # (Tq, Dh)
        y_out = y_out + jnp.dot(y.astype(bf16), aout_w_ref[h],
                                preferred_element_type=jnp.float32)       # (Tq, C)
    y_out = y_out + aout_b_ref[...]

    # ---- residual (uses the *normalized* q, matching
    #      `q = self.ln_1(q); x = q + self.attn(q, kv, kv)`) + feed-forward ----
    x = qn + y_out
    xn = _layernorm(x, ln_w_ref[2], ln_b_ref[2])
    hm = jnp.dot(xn.astype(bf16), mfc_w_ref[...],
                 preferred_element_type=jnp.float32) + mfc_b_ref[...]
    hm = _gelu(hm).astype(bf16)
    x = x + jnp.dot(hm, mpj_w_ref[...],
                    preferred_element_type=jnp.float32) + mpj_b_ref[...]

    # TODO(synk): dropout layers (p=0.3 in attention and MLPs) are identity here
    # (eval mode); training-mode stochastic dropout is not implemented.
    o_ref[0] = x.astype(o_ref.dtype)


# ------------------------------- wrapper ------------------------------------ #
def block_forward(q, kv, params, n_head=2, tile_q=256):
    B, Tq, C = q.shape
    Bk, Tk, Ck = kv.shape
    assert Bk == B and Ck == C
    assert C % n_head == 0, "cov_emb must be divisible by n_head"
    Dh = C // n_head
    H = params["attn_fc_w"].shape[-1]
    assert H % 128 == 0, ("hidden size (factor*cov_emb) must be a multiple of 128 "
                          "so the fused k/v activation slice is lane-aligned")
    tile_q = min(tile_q, Tq)
    assert Tq % tile_q == 0, "Tq must be divisible by tile_q"
    assert tile_q % 8 == 0 or tile_q == Tq
    scale = 1.0 / math.sqrt(Dh)
    bf16 = jnp.bfloat16

    # bf16 activations into the kernels (LN / softmax / GELU math stays f32 inside)
    q = q.astype(bf16)
    kv = kv.astype(bf16)

    ln_w, ln_b = params["ln_w"], params["ln_b"]                           # (3, 1, C)

    # ---- K/V-projection weights (second Linears pre-transposed per head) ----
    kvfc_w = jnp.concatenate([params["attn_fc_w"][1],
                              params["attn_fc_w"][2]], axis=1).astype(bf16)   # (C, 2H)
    kvfc_b = jnp.concatenate([params["attn_fc_b"][1],
                              params["attn_fc_b"][2]], axis=1)                # (1, 2H)

    def head_wT(w):   # (H, C) -> (n_head, Dh, H)
        return w.reshape(H, n_head, Dh).transpose(1, 2, 0)

    def head_bT(b):   # (1, C) -> (n_head, Dh, 1)
        return b.reshape(1, n_head, Dh).transpose(1, 2, 0)

    kpjT_w = head_wT(params["attn_pj_w"][1]).astype(bf16)
    kpjT_b = head_bT(params["attn_pj_b"][1])
    vpjT_w = head_wT(params["attn_pj_w"][2]).astype(bf16)
    vpjT_b = head_bT(params["attn_pj_b"][2])

    # ---- main-kernel weights (attention scale folded into the q projection) ----
    qfc_w = params["attn_fc_w"][0].astype(bf16)                               # (C, H)
    qfc_b = params["attn_fc_b"][0]                                            # (1, H)
    qpj_w = (params["attn_pj_w"][0] * scale).reshape(H, n_head, Dh) \
                                            .transpose(1, 0, 2).astype(bf16)  # (n, H, Dh)
    qpj_b = (params["attn_pj_b"][0] * scale).reshape(1, n_head, Dh) \
                                            .transpose(1, 0, 2)               # (n, 1, Dh)
    aout_w = params["attn_out_w"].reshape(n_head, Dh, C).astype(bf16)         # (n, Dh, C)
    aout_b = params["attn_out_b"]                                             # (1, C)
    mfc_w = params["mlp_fc_w"].astype(bf16)
    mfc_b = params["mlp_fc_b"]
    mpj_w = params["mlp_pj_w"].astype(bf16)
    mpj_b = params["mlp_pj_b"]

    def nbytes(*arrs):
        return int(sum(a.size * a.dtype.itemsize for a in arrs))

    # -------------------- pass 1: K/V projection (grid over B) ----------------
    kv_weights = [ln_w, ln_b, kvfc_w, kvfc_b, kpjT_w, kpjT_b, vpjT_w, vpjT_b]

    def wspec_b(shape):   # grid-invariant weight: resident once, single-buffered
        nd = len(shape)
        return pl.BlockSpec(shape, lambda b, _nd=nd: (0,) * _nd,
                            pipeline_mode=pl.Buffered(1))

    kv_cost = pl.CostEstimate(
        flops=int(8 * B * Tk * C * H),
        transcendentals=int(2 * B * Tk * H),
        bytes_accessed=nbytes(kv) + 4 * B * C * Tk + nbytes(*kv_weights))

    kT, vT = pl.pallas_call(
        kv_proj_kernel,
        out_shape=(jax.ShapeDtypeStruct((B, n_head, Dh, Tk), bf16),
                   jax.ShapeDtypeStruct((B, n_head, Dh, Tk), bf16)),
        grid=(B,),
        in_specs=[pl.BlockSpec((1, Tk, C), lambda b: (b, 0, 0))]
                 + [wspec_b(w.shape) for w in kv_weights],
        out_specs=(pl.BlockSpec((1, n_head, Dh, Tk), lambda b: (b, 0, 0, 0)),
                   pl.BlockSpec((1, n_head, Dh, Tk), lambda b: (b, 0, 0, 0))),
        compiler_params=pltpu.CompilerParams(
            dimension_semantics=("parallel",),
            vmem_limit_bytes=48 * 1024 * 1024),
        cost_estimate=kv_cost,
    )(kv, *kv_weights)

    # ------------- pass 2: q path + attention + MLP (B x q-tiles) -------------
    weights = [ln_w, ln_b, qfc_w, qfc_b, qpj_w, qpj_b,
               aout_w, aout_b, mfc_w, mfc_b, mpj_w, mpj_b]

    def wspec_bt(shape):
        nd = len(shape)
        return pl.BlockSpec(shape, lambda b, t, _nd=nd: (0,) * _nd,
                            pipeline_mode=pl.Buffered(1))

    main_cost = pl.CostEstimate(
        flops=int(B * Tq * (8 * C * H + 4 * Tk * C + 2 * C * C)),
        transcendentals=int(B * Tq * (2 * H + n_head * Tk)),
        bytes_accessed=nbytes(q) + 4 * B * C * Tk + B * Tq * C * 4
                       + nbytes(*weights))

    # TODO(synk): for large Tk, tile the attention over Tk with an online
    # (flash-style) softmax instead of holding full-Tk K/V and scores in VMEM.
    return pl.pallas_call(
        block_attn_kernel,
        out_shape=jax.ShapeDtypeStruct((B, Tq, C), jnp.float32),
        grid=(B, Tq // tile_q),
        in_specs=[pl.BlockSpec((1, tile_q, C), lambda b, t: (b, t, 0)),
                  pl.BlockSpec((1, n_head, Dh, Tk), lambda b, t: (b, 0, 0, 0)),
                  pl.BlockSpec((1, n_head, Dh, Tk), lambda b, t: (b, 0, 0, 0))]
                 + [wspec_bt(w.shape) for w in weights],
        out_specs=pl.BlockSpec((1, tile_q, C), lambda b, t: (b, t, 0)),
        compiler_params=pltpu.CompilerParams(
            dimension_semantics=("parallel", "parallel"),
            vmem_limit_bytes=48 * 1024 * 1024),
        cost_estimate=main_cost,
    )(q, kT, vT, *weights)


# --------------------------- parameter init --------------------------------- #
def init_params(key, C, factor=2):
    H = factor * C  # hidden size of every MLP (factor * out_size)

    def lin(k, fan_in, fan_out):
        kw, kb = jax.random.split(k)
        w = jax.random.normal(kw, (fan_in, fan_out), jnp.float32) * 0.02
        b = jax.random.normal(kb, (1, fan_out), jnp.float32) * 0.01
        return w, b

    keys = jax.random.split(key, 10)
    afc_w, afc_b, apj_w, apj_b = [], [], [], []
    for i in range(3):  # q, k, v attention projection MLPs
        w1, b1 = lin(keys[i], C, H)
        w2, b2 = lin(keys[3 + i], H, C)
        afc_w.append(w1); afc_b.append(b1); apj_w.append(w2); apj_b.append(b2)

    aout_w, aout_b = lin(keys[6], C, C)
    mfc_w, mfc_b = lin(keys[7], C, H)
    mpj_w, mpj_b = lin(keys[8], H, C)

    return {
        "ln_w": jnp.ones((3, 1, C), jnp.float32),   # LayerNorm weight=1, bias=0
        "ln_b": jnp.zeros((3, 1, C), jnp.float32),
        "attn_fc_w": jnp.stack(afc_w),   # (3, C, H)
        "attn_fc_b": jnp.stack(afc_b),   # (3, 1, H)
        "attn_pj_w": jnp.stack(apj_w),   # (3, H, C)
        "attn_pj_b": jnp.stack(apj_b),   # (3, 1, C)
        "attn_out_w": aout_w,            # (C, C)
        "attn_out_b": aout_b,            # (1, C)
        "mlp_fc_w": mfc_w,               # (C, H)
        "mlp_fc_b": mfc_b,               # (1, H)
        "mlp_pj_w": mpj_w,               # (H, C)
        "mlp_pj_b": mpj_b,               # (1, C)
    }


# ------------------------- pure-JAX reference -------------------------------- #
def block_reference(q, kv, p, n_head=2):
    def ln(x, w, b):
        mu = jnp.mean(x, -1, keepdims=True)
        var = jnp.mean((x - mu) ** 2, -1, keepdims=True)
        return (x - mu) / jnp.sqrt(var + 1e-5) * w + b

    def gelu(x):
        return 0.5 * x * (1.0 + lax.erf(x / jnp.sqrt(2.0)))

    def mlp(x, fw, fb, pw, pb):
        return gelu(x @ fw + fb) @ pw + pb

    B, Tq, C = q.shape
    Dh = C // n_head
    qn = ln(q, p["ln_w"][0], p["ln_b"][0])
    kvn = ln(kv, p["ln_w"][1], p["ln_b"][1])
    qp = mlp(qn, p["attn_fc_w"][0], p["attn_fc_b"][0], p["attn_pj_w"][0], p["attn_pj_b"][0])
    kp = mlp(kvn, p["attn_fc_w"][1], p["attn_fc_b"][1], p["attn_pj_w"][1], p["attn_pj_b"][1])
    vp = mlp(kvn, p["attn_fc_w"][2], p["attn_fc_b"][2], p["attn_pj_w"][2], p["attn_pj_b"][2])

    def split(x):  # (B, T, C) -> (B, H, T, Dh)
        return x.reshape(B, x.shape[1], n_head, Dh).transpose(0, 2, 1, 3)

    qh, kh, vh = split(qp), split(kp), split(vp)
    att = jnp.einsum("bhqd,bhkd->bhqk", qh, kh) / math.sqrt(Dh)
    att = jax.nn.softmax(att, axis=-1)
    y = jnp.einsum("bhqk,bhkd->bhqd", att, vh)
    y = y.transpose(0, 2, 1, 3).reshape(B, Tq, C)
    y = y @ p["attn_out_w"] + p["attn_out_b"]

    x = qn + y
    x = x + mlp(ln(x, p["ln_w"][2], p["ln_b"][2]),
                p["mlp_fc_w"], p["mlp_fc_b"], p["mlp_pj_w"], p["mlp_pj_b"])
    return x


# ---------------------------------- main ------------------------------------ #
if __name__ == "__main__":
    # C multiple of 128 (lane-dense loads/stores); Tq = one full tile per batch elem.
    B, Tq, Tk, C, n_head = 2, 128, 128, 128, 2

    key = jax.random.PRNGKey(0)
    kq, kkv, kp = jax.random.split(key, 3)
    q = jax.random.normal(kq, (B, Tq, C), jnp.float32)
    kv = jax.random.normal(kkv, (B, Tk, C), jnp.float32)
    params = init_params(kp, C, factor=2)

    out = jax.block_until_ready(block_forward(q, kv, params, n_head=n_head))
    ref = block_reference(q, kv, params, n_head=n_head)

    assert out.shape == (B, Tq, C)
    max_err = float(jnp.max(jnp.abs(out - ref)))
    # bf16 activations at the call boundary + bf16 MXU operands (f32 accumulate)
    # -> loosened tolerance vs the all-f32 reference.
    assert max_err < 5e-2, max_err
    print("KERNEL_OK")
</pallas_src>

<mosaic_0001>
module attributes {stable_mosaic.version = 11 : i64} {
  func.func @kv_proj_kernel(%arg0: i32, %arg1: memref<1x128x128xbf16, #tpu.memory_space<vmem>>, %arg2: memref<3x1x128xf32, #tpu.memory_space<vmem>>, %arg3: memref<3x1x128xf32, #tpu.memory_space<vmem>>, %arg4: memref<128x512xbf16, #tpu.memory_space<vmem>>, %arg5: memref<1x512xf32, #tpu.memory_space<vmem>>, %arg6: memref<2x64x256xbf16, #tpu.memory_space<vmem>>, %arg7: memref<2x64x1xf32, #tpu.memory_space<vmem>>, %arg8: memref<2x64x256xbf16, #tpu.memory_space<vmem>>, %arg9: memref<2x64x1xf32, #tpu.memory_space<vmem>>, %arg10: memref<1x2x64x128xbf16, #tpu.memory_space<vmem>>, %arg11: memref<1x2x64x128xbf16, #tpu.memory_space<vmem>>) attributes {dimension_semantics = [#tpu.dimension_semantics<parallel>], iteration_bounds = array<i64: 2>, scalar_prefetch = 0 : i64, scratch_operands = 0 : i64, tpu.core_type = #tpu.core_type<tc>, window_params = [{transform_indices = @transform_0, window_bounds = array<i64: 1, 128, 128>}, {pipeline_mode = #tpu.pipeline_mode<synchronous>, transform_indices = @transform_1, window_bounds = array<i64: 3, 1, 128>}, {pipeline_mode = #tpu.pipeline_mode<synchronous>, transform_indices = @transform_2, window_bounds = array<i64: 3, 1, 128>}, {pipeline_mode = #tpu.pipeline_mode<synchronous>, transform_indices = @transform_3, window_bounds = array<i64: 128, 512>}, {pipeline_mode = #tpu.pipeline_mode<synchronous>, transform_indices = @transform_4, window_bounds = array<i64: 1, 512>}, {pipeline_mode = #tpu.pipeline_mode<synchronous>, transform_indices = @transform_5, window_bounds = array<i64: 2, 64, 256>}, {pipeline_mode = #tpu.pipeline_mode<synchronous>, transform_indices = @transform_6, window_bounds = array<i64: 2, 64, 1>}, {pipeline_mode = #tpu.pipeline_mode<synchronous>, transform_indices = @transform_7, window_bounds = array<i64: 2, 64, 256>}, {pipeline_mode = #tpu.pipeline_mode<synchronous>, transform_indices = @transform_8, window_bounds = array<i64: 2, 64, 1>}, {transform_indices = @transform_9, window_bounds = array<i64: 1, 2, 64, 128>}, {transform_indices = @transform_10, window_bounds = array<i64: 1, 2, 64, 128>}]} {
    %c0 = arith.constant 0 : index
    %c0_0 = arith.constant 0 : index
    %c0_1 = arith.constant 0 : index
    %0 = vector.load %arg1[%c0, %c0_0, %c0_1] : memref<1x128x128xbf16, #tpu.memory_space<vmem>>, vector<1x128x128xbf16>
    %1 = vector.shape_cast %0 : vector<1x128x128xbf16> to vector<128x128xbf16>
    %c1 = arith.constant 1 : index
    %c0_2 = arith.constant 0 : index
    %c0_3 = arith.constant 0 : index
    %2 = vector.load %arg2[%c1, %c0_2, %c0_3] : memref<3x1x128xf32, #tpu.memory_space<vmem>>, vector<1x1x128xf32>
    %3 = vector.shape_cast %2 : vector<1x1x128xf32> to vector<1x128xf32>
    %c1_4 = arith.constant 1 : index
    %c0_5 = arith.constant 0 : index
    %c0_6 = arith.constant 0 : index
    %4 = vector.load %arg3[%c1_4, %c0_5, %c0_6] : memref<3x1x128xf32, #tpu.memory_space<vmem>>, vector<1x1x128xf32>
    %5 = vector.shape_cast %4 : vector<1x1x128xf32> to vector<1x128xf32>
    %6 = arith.extf %1 : vector<128x128xbf16> to vector<128x128xf32>
    %cst = arith.constant dense<0.000000e+00> : vector<128xf32>
    %7 = vector.multi_reduction <add>, %6, %cst [1] : vector<128x128xf32> to vector<128xf32>
    %8 = vector.shape_cast %7 : vector<128xf32> to vector<128x1xf32>
    %cst_7 = arith.constant 1.280000e+02 : f32
    %9 = vector.broadcast %cst_7 : f32 to vector<128x1xf32>
    %10 = arith.divf %8, %9 : vector<128x1xf32>
    %11 = vector.broadcast %10 : vector<128x1xf32> to vector<128x128xf32>
    %12 = arith.subf %6, %11 : vector<128x128xf32>
    %13 = arith.mulf %12, %12 : vector<128x128xf32>
    %cst_8 = arith.constant dense<0.000000e+00> : vector<128xf32>
    %14 = vector.multi_reduction <add>, %13, %cst_8 [1] : vector<128x128xf32> to vector<128xf32>
    %15 = vector.shape_cast %14 : vector<128xf32> to vector<128x1xf32>
    %cst_9 = arith.constant 1.280000e+02 : f32
    %16 = vector.broadcast %cst_9 : f32 to vector<128x1xf32>
    %17 = arith.divf %15, %16 : vector<128x1xf32>
    %18 = vector.broadcast %10 : vector<128x1xf32> to vector<128x128xf32>
    %19 = arith.subf %6, %18 : vector<128x128xf32>
    %cst_10 = arith.constant 9.99999974E-6 : f32
    %20 = vector.broadcast %cst_10 : f32 to vector<128x1xf32>
    %21 = arith.addf %17, %20 : vector<128x1xf32>
    %22 = math.rsqrt %21 : vector<128x1xf32>
    %23 = vector.broadcast %22 : vector<128x1xf32> to vector<128x128xf32>
    %24 = arith.mulf %19, %23 : vector<128x128xf32>
    %25 = vector.broadcast %3 : vector<1x128xf32> to vector<128x128xf32>
    %26 = arith.mulf %24, %25 : vector<128x128xf32>
    %27 = vector.broadcast %5 : vector<1x128xf32> to vector<128x128xf32>
    %28 = arith.addf %26, %27 : vector<128x128xf32>
    %29 = arith.truncf %28 : vector<128x128xf32> to vector<128x128xbf16>
    %c0_11 = arith.constant 0 : index
    %c0_12 = arith.constant 0 : index
    %30 = vector.load %arg4[%c0_11, %c0_12] : memref<128x512xbf16, #tpu.memory_space<vmem>>, vector<128x512xbf16>
    %cst_13 = arith.constant dense<0.000000e+00> : vector<128x512xf32>
    %31 = tpu.matmul %29, %30, %cst_13 {dimension_numbers = #tpu.dot_dimension_numbers<[1], [0], [0], [1], [0, 0, 1, 1], [], []>} : vector<128x128xbf16>, vector<128x512xbf16>, vector<128x512xf32> -> vector<128x512xf32>
    %c0_14 = arith.constant 0 : index
    %c0_15 = arith.constant 0 : index
    %32 = vector.load %arg5[%c0_14, %c0_15] : memref<1x512xf32, #tpu.memory_space<vmem>>, vector<1x512xf32>
    %33 = vector.broadcast %32 : vector<1x512xf32> to vector<128x512xf32>
    %34 = arith.addf %31, %33 : vector<128x512xf32>
    %cst_16 = arith.constant 5.000000e-01 : f32
    %35 = vector.broadcast %cst_16 : f32 to vector<128x512xf32>
    %36 = arith.mulf %35, %34 : vector<128x512xf32>
    %cst_17 = arith.constant 0.707106769 : f32
    %37 = vector.broadcast %cst_17 : f32 to vector<128x512xf32>
    %38 = arith.mulf %34, %37 : vector<128x512xf32>
    %39 = math.erf %38 : vector<128x512xf32>
    %cst_18 = arith.constant 1.000000e+00 : f32
    %40 = vector.broadcast %cst_18 : f32 to vector<128x512xf32>
    %41 = arith.addf %40, %39 : vector<128x512xf32>
    %42 = arith.mulf %36, %41 : vector<128x512xf32>
    %43 = arith.truncf %42 : vector<128x512xf32> to vector<128x512xbf16>
    %44 = vector.extract_strided_slice %43 {offsets = [0, 0], sizes = [128, 256], strides = [1, 1]} : vector<128x512xbf16> to vector<128x256xbf16>
    %45 = vector.extract_strided_slice %43 {offsets = [0, 256], sizes = [128, 256], strides = [1, 1]} : vector<128x512xbf16> to vector<128x256xbf16>
    %c0_19 = arith.constant 0 : index
    %c0_20 = arith.constant 0 : index
    %c0_21 = arith.constant 0 : index
    %46 = vector.load %arg6[%c0_19, %c0_20, %c0_21] : memref<2x64x256xbf16, #tpu.memory_space<vmem>>, vector<1x64x256xbf16>
    %47 = vector.shape_cast %46 : vector<1x64x256xbf16> to vector<64x256xbf16>
    %cst_22 = arith.constant dense<0.000000e+00> : vector<64x128xf32>
    %48 = tpu.matmul %47, %44, %cst_22 {dimension_numbers = #tpu.dot_dimension_numbers<[1], [1], [0], [0], [0, 0, 1, 0], [], []>} : vector<64x256xbf16>, vector<128x256xbf16>, vector<64x128xf32> -> vector<64x128xf32>
    %c0_23 = arith.constant 0 : index
    %c0_24 = arith.constant 0 : index
    %c0_25 = arith.constant 0 : index
    %49 = vector.load %arg7[%c0_23, %c0_24, %c0_25] : memref<2x64x1xf32, #tpu.memory_space<vmem>>, vector<1x64x1xf32>
    %50 = vector.shape_cast %49 : vector<1x64x1xf32> to vector<64x1xf32>
    %51 = vector.broadcast %50 : vector<64x1xf32> to vector<64x128xf32>
    %52 = arith.addf %48, %51 : vector<64x128xf32>
    %c0_26 = arith.constant 0 : index
    %c0_27 = arith.constant 0 : index
    %c0_28 = arith.constant 0 : index
    %53 = vector.load %arg8[%c0_26, %c0_27, %c0_28] : memref<2x64x256xbf16, #tpu.memory_space<vmem>>, vector<1x64x256xbf16>
    %54 = vector.shape_cast %53 : vector<1x64x256xbf16> to vector<64x256xbf16>
    %cst_29 = arith.constant dense<0.000000e+00> : vector<64x128xf32>
    %55 = tpu.matmul %54, %45, %cst_29 {dimension_numbers = #tpu.dot_dimension_numbers<[1], [1], [0], [0], [0, 0, 1, 0], [], []>} : vector<64x256xbf16>, vector<128x256xbf16>, vector<64x128xf32> -> vector<64x128xf32>
    %c0_30 = arith.constant 0 : index
    %c0_31 = arith.constant 0 : index
    %c0_32 = arith.constant 0 : index
    %56 = vector.load %arg9[%c0_30, %c0_31, %c0_32] : memref<2x64x1xf32, #tpu.memory_space<vmem>>, vector<1x64x1xf32>
    %57 = vector.shape_cast %56 : vector<1x64x1xf32> to vector<64x1xf32>
    %58 = vector.broadcast %57 : vector<64x1xf32> to vector<64x128xf32>
    %59 = arith.addf %55, %58 : vector<64x128xf32>
    %60 = arith.truncf %52 : vector<64x128xf32> to vector<64x128xbf16>
    %c0_33 = arith.constant 0 : index
    %c0_34 = arith.constant 0 : index
    %c0_35 = arith.constant 0 : index
    %c0_36 = arith.constant 0 : index
    %61 = vector.load %arg10[%c0_33, %c0_34, %c0_35, %c0_36] : memref<1x2x64x128xbf16, #tpu.memory_space<vmem>>, vector<1x1x64x128xbf16>
    %62 = vector.shape_cast %61 : vector<1x1x64x128xbf16> to vector<64x128xbf16>
    %63 = vector.shape_cast %60 : vector<64x128xbf16> to vector<1x1x64x128xbf16>
    tpu.vector_store %arg10[%c0_33, %c0_34, %c0_35, %c0_36], %63 {strides = array<i32>} : memref<1x2x64x128xbf16, #tpu.memory_space<vmem>>, vector<1x1x64x128xbf16>,
    %64 = arith.truncf %59 : vector<64x128xf32> to vector<64x128xbf16>
    %c0_37 = arith.constant 0 : index
    %c0_38 = arith.constant 0 : index
    %c0_39 = arith.constant 0 : index
    %c0_40 = arith.constant 0 : index
    %65 = vector.load %arg11[%c0_37, %c0_38, %c0_39, %c0_40] : memref<1x2x64x128xbf16, #tpu.memory_space<vmem>>, vector<1x1x64x128xbf16>
    %66 = vector.shape_cast %65 : vector<1x1x64x128xbf16> to vector<64x128xbf16>
    %67 = vector.shape_cast %64 : vector<64x128xbf16> to vector<1x1x64x128xbf16>
    tpu.vector_store %arg11[%c0_37, %c0_38, %c0_39, %c0_40], %67 {strides = array<i32>} : memref<1x2x64x128xbf16, #tpu.memory_space<vmem>>, vector<1x1x64x128xbf16>,
    %c1_41 = arith.constant 1 : index
    %c0_42 = arith.constant 0 : index
    %c0_43 = arith.constant 0 : index
    %68 = vector.load %arg6[%c1_41, %c0_42, %c0_43] : memref<2x64x256xbf16, #tpu.memory_space<vmem>>, vector<1x64x256xbf16>
    %69 = vector.shape_cast %68 : vector<1x64x256xbf16> to vector<64x256xbf16>
    %cst_44 = arith.constant dense<0.000000e+00> : vector<64x128xf32>
    %70 = tpu.matmul %69, %44, %cst_44 {dimension_numbers = #tpu.dot_dimension_numbers<[1], [1], [0], [0], [0, 0, 1, 0], [], []>} : vector<64x256xbf16>, vector<128x256xbf16>, vector<64x128xf32> -> vector<64x128xf32>
    %c1_45 = arith.constant 1 : index
    %c0_46 = arith.constant 0 : index
    %c0_47 = arith.constant 0 : index
    %71 = vector.load %arg7[%c1_45, %c0_46, %c0_47] : memref<2x64x1xf32, #tpu.memory_space<vmem>>, vector<1x64x1xf32>
    %72 = vector.shape_cast %71 : vector<1x64x1xf32> to vector<64x1xf32>
    %73 = vector.broadcast %72 : vector<64x1xf32> to vector<64x128xf32>
    %74 = arith.addf %70, %73 : vector<64x128xf32>
    %c1_48 = arith.constant 1 : index
    %c0_49 = arith.constant 0 : index
    %c0_50 = arith.constant 0 : index
    %75 = vector.load %arg8[%c1_48, %c0_49, %c0_50] : memref<2x64x256xbf16, #tpu.memory_space<vmem>>, vector<1x64x256xbf16>
    %76 = vector.shape_cast %75 : vector<1x64x256xbf16> to vector<64x256xbf16>
    %cst_51 = arith.constant dense<0.000000e+00> : vector<64x128xf32>
    %77 = tpu.matmul %76, %45, %cst_51 {dimension_numbers = #tpu.dot_dimension_numbers<[1], [1], [0], [0], [0, 0, 1, 0], [], []>} : vector<64x256xbf16>, vector<128x256xbf16>, vector<64x128xf32> -> vector<64x128xf32>
    %c1_52 = arith.constant 1 : index
    %c0_53 = arith.constant 0 : index
    %c0_54 = arith.constant 0 : index
    %78 = vector.load %arg9[%c1_52, %c0_53, %c0_54] : memref<2x64x1xf32, #tpu.memory_space<vmem>>, vector<1x64x1xf32>
    %79 = vector.shape_cast %78 : vector<1x64x1xf32> to vector<64x1xf32>
    %80 = vector.broadcast %79 : vector<64x1xf32> to vector<64x128xf32>
    %81 = arith.addf %77, %80 : vector<64x128xf32>
    %82 = arith.truncf %74 : vector<64x128xf32> to vector<64x128xbf16>
    %c0_55 = arith.constant 0 : index
    %c1_56 = arith.constant 1 : index
    %c0_57 = arith.constant 0 : index
    %c0_58 = arith.constant 0 : index
    %83 = vector.load %arg10[%c0_55, %c1_56, %c0_57, %c0_58] : memref<1x2x64x128xbf16, #tpu.memory_space<vmem>>, vector<1x1x64x128xbf16>
    %84 = vector.shape_cast %83 : vector<1x1x64x128xbf16> to vector<64x128xbf16>
    %85 = vector.shape_cast %82 : vector<64x128xbf16> to vector<1x1x64x128xbf16>
    tpu.vector_store %arg10[%c0_55, %c1_56, %c0_57, %c0_58], %85 {strides = array<i32>} : memref<1x2x64x128xbf16, #tpu.memory_space<vmem>>, vector<1x1x64x128xbf16>,
    %86 = arith.truncf %81 : vector<64x128xf32> to vector<64x128xbf16>
    %c0_59 = arith.constant 0 : index
    %c1_60 = arith.constant 1 : index
    %c0_61 = arith.constant 0 : index
    %c0_62 = arith.constant 0 : index
    %87 = vector.load %arg11[%c0_59, %c1_60, %c0_61, %c0_62] : memref<1x2x64x128xbf16, #tpu.memory_space<vmem>>, vector<1x1x64x128xbf16>
    %88 = vector.shape_cast %87 : vector<1x1x64x128xbf16> to vector<64x128xbf16>
    %89 = vector.shape_cast %86 : vector<64x128xbf16> to vector<1x1x64x128xbf16>
    tpu.vector_store %arg11[%c0_59, %c1_60, %c0_61, %c0_62], %89 {strides = array<i32>} : memref<1x2x64x128xbf16, #tpu.memory_space<vmem>>, vector<1x1x64x128xbf16>,
    return
  }
  func.func @transform_0(%arg0: i32) -> (i32, i32, i32) {
    %c0_i32 = arith.constant 0 : i32
    %c0_i32_0 = arith.constant 0 : i32
    %c0_i32_1 = arith.constant 0 : i32
    return %arg0, %c0_i32, %c0_i32_0 : i32, i32, i32
  }
  func.func @transform_1(%arg0: i32) -> (i32, i32, i32) {
    %c0_i32 = arith.constant 0 : i32
    %c0_i32_0 = arith.constant 0 : i32
    %c0_i32_1 = arith.constant 0 : i32
    %c0_i32_2 = arith.constant 0 : i32
    return %c0_i32, %c0_i32_0, %c0_i32_1 : i32, i32, i32
  }
  func.func @transform_2(%arg0: i32) -> (i32, i32, i32) {
    %c0_i32 = arith.constant 0 : i32
    %c0_i32_0 = arith.constant 0 : i32
    %c0_i32_1 = arith.constant 0 : i32
    %c0_i32_2 = arith.constant 0 : i32
    return %c0_i32, %c0_i32_0, %c0_i32_1 : i32, i32, i32
  }
  func.func @transform_3(%arg0: i32) -> (i32, i32) {
    %c0_i32 = arith.constant 0 : i32
    %c0_i32_0 = arith.constant 0 : i32
    %c0_i32_1 = arith.constant 0 : i32
    return %c0_i32, %c0_i32_0 : i32, i32
  }
  func.func @transform_4(%arg0: i32) -> (i32, i32) {
    %c0_i32 = arith.constant 0 : i32
    %c0_i32_0 = arith.constant 0 : i32
    %c0_i32_1 = arith.constant 0 : i32
    return %c0_i32, %c0_i32_0 : i32, i32
  }
  func.func @transform_5(%arg0: i32) -> (i32, i32, i32) {
    %c0_i32 = arith.constant 0 : i32
    %c0_i32_0 = arith.constant 0 : i32
    %c0_i32_1 = arith.constant 0 : i32
    %c0_i32_2 = arith.constant 0 : i32
    return %c0_i32, %c0_i32_0, %c0_i32_1 : i32, i32, i32
  }
  func.func @transform_6(%arg0: i32) -> (i32, i32, i32) {
    %c0_i32 = arith.constant 0 : i32
    %c0_i32_0 = arith.constant 0 : i32
    %c0_i32_1 = arith.constant 0 : i32
    %c0_i32_2 = arith.constant 0 : i32
    return %c0_i32, %c0_i32_0, %c0_i32_1 : i32, i32, i32
  }
  func.func @transform_7(%arg0: i32) -> (i32, i32, i32) {
    %c0_i32 = arith.constant 0 : i32
    %c0_i32_0 = arith.constant 0 : i32
    %c0_i32_1 = arith.constant 0 : i32
    %c0_i32_2 = arith.constant 0 : i32
    return %c0_i32, %c0_i32_0, %c0_i32_1 : i32, i32, i32
  }
  func.func @transform_8(%arg0: i32) -> (i32, i32, i32) {
    %c0_i32 = arith.constant 0 : i32
    %c0_i32_0 = arith.constant 0 : i32
    %c0_i32_1 = arith.constant 0 : i32
    %c0_i32_2 = arith.constant 0 : i32
    return %c0_i32, %c0_i32_0, %c0_i32_1 : i32, i32, i32
  }
  func.func @transform_9(%arg0: i32) -> (i32, i32, i32, i32) {
    %c0_i32 = arith.constant 0 : i32
    %c0_i32_0 = arith.constant 0 : i32
    %c0_i32_1 = arith.constant 0 : i32
    %c0_i32_2 = arith.constant 0 : i32
    return %arg0, %c0_i32, %c0_i32_0, %c0_i32_1 : i32, i32, i32, i32
  }
  func.func @transform_10(%arg0: i32) -> (i32, i32, i32, i32) {
    %c0_i32 = arith.constant 0 : i32
    %c0_i32_0 = arith.constant 0 : i32
    %c0_i32_1 = arith.constant 0 : i32
    %c0_i32_2 = arith.constant 0 : i32
    return %arg0, %c0_i32, %c0_i32_0, %c0_i32_1 : i32, i32, i32, i32
  }
}

</mosaic_0001>

<llo_original>
// kernel: tpu_custom_call.1
$region0: #{tpu_custom_call.1}
  #allocation0 [shape = 'u32[]', space=smem, size = 0x4, offset = 0x4, fixed_abs, tag = 'smem constant byte address 0x4 - core index']
  #allocation1 [shape = 'u32[144,128]{1,0:T(1,128)}', space=vmem, size = 0x12000, scoped, tag = 'internal scratch']
  %s0 = inlined_call_operand.hbm [shape: bf16[2,128,128], index: 0, kind: input, shape index: {}]
  %s1 = inlined_call_operand.vmem [shape: f32[3,1,128], index: 1, kind: input, shape index: {}]
  %s2 = inlined_call_operand.vmem [shape: f32[3,1,128], index: 2, kind: input, shape index: {}]
  %s3 = inlined_call_operand.vmem [shape: bf16[128,512], index: 3, kind: input, shape index: {}]
  %s4 = inlined_call_operand.vmem [shape: f32[1,512], index: 4, kind: input, shape index: {}]
  %s5 = inlined_call_operand.hbm [shape: bf16[2,64,256], index: 5, kind: input, shape index: {}]
  %s6 = inlined_call_operand.vmem [shape: f32[2,64,1], index: 6, kind: input, shape index: {}]
  %s7 = inlined_call_operand.hbm [shape: bf16[2,64,256], index: 7, kind: input, shape index: {}]
  %s8 = inlined_call_operand.vmem [shape: f32[2,64,1], index: 8, kind: input, shape index: {}]
  %s9 = inlined_call_operand.hbm [shape: bf16[2,2,64,128], index: 9, kind: output, shape index: {0}]
  %s10 = inlined_call_operand.hbm [shape: bf16[2,2,64,128], index: 10, kind: output, shape index: {1}]
  %11 = xla_tuple %s9, %s10
  %s12 = sld [smem:[#allocation0]]
  $region89: #{tpu_custom_call.1} parent=0
    _
  %s14 = ssub.s32 1, %s12
  %s15 = scalar_select 0, %s14, %s12
  $region1: #{tpu_custom_call.1} parent=0
    #allocation2 [shape = 'u8[65536]{0}', space=vmem, size = 0x10000, scoped, tag = 'input window, operand 0']
    #allocation3 [shape = 's32[2]{0}', space=sflag, size = 0x8, scoped, tag = 'scoped memory for tpu_custom_call.1']
    #allocation4 [shape = 's32[2]{0}', space=sflag, size = 0x8, scoped, tag = 'scoped memory for tpu_custom_call.1']
    #allocation5 [shape = 'u8[65536]{0}', space=vmem, size = 0x10000, scoped, tag = 'input window, operand 5, single buffered']
    #allocation6 [shape = 's32[1]{0}', space=sflag, size = 0x4, scoped, tag = 'scoped memory for tpu_custom_call.1']
    #allocation7 [shape = 'u8[65536]{0}', space=vmem, size = 0x10000, scoped, tag = 'input window, operand 7, single buffered']
    #allocation8 [shape = 'u8[65536]{0}', space=vmem, size = 0x10000, scoped, tag = 'output window, operand 0']
    #allocation9 [shape = 'u8[65536]{0}', space=vmem, size = 0x10000, scoped, tag = 'output window, operand 1']
    #allocation10 [shape = 's32[2]{0}', space=sflag, size = 0x8, scoped, tag = 'scoped memory for tpu_custom_call.1']
    %16 = vsyncpa [#allocation3], 0
    %s17 = scalar_lea.sflag [#allocation3], 1
    %18 = vsyncpa %s17, 0
    %19 = vsyncpa [#allocation6], 0
    %20 = vsyncpa [#allocation4], 0
    %s21 = scalar_lea.sflag [#allocation4], 1
    %22 = vsyncpa %s21, 0
    %23 = vsyncpa [#allocation10], 0
    %s24 = scalar_lea.sflag [#allocation10], 1
    %25 = vsyncpa %s24, 0
    loop: start=0, step=1, limit=4
    $region2: #{tpu_custom_call.1} parent=1 // loop_pre_header
      _
    $region3: #{tpu_custom_call.1} parent=1 // loop_header
      %s27 = sphi 0, %s31
      %p28 = scmp.ge.s32.totalorder %s27, 4
      %s37 = sphi 0, %s39
      %s40 = sphi 0, %s37
      %s41 = sphi 0, %s40
      %s57 = sphi 0, %s41
      %s61 = sphi 0, %s61
      %s63 = sphi 0, %s61
      %s64 = sphi 0, %s63
      %s78 = sphi 0, %s64
      %s82 = sphi 0, %s82
      %s84 = sphi 0, %s82
      %s85 = sphi 0, %s84
      %s99 = sphi 0, %s85
      %s103 = sphi 0, %s103
      %s105 = sphi 0, %s103
      %s106 = sphi 0, %s105
      %s120 = sphi 0, %s106
      %s124 = sphi 0, %s124
      %s126 = sphi 0, %s124
      %s127 = sphi 0, %s126
      %s141 = sphi 0, %s127
      %s145 = sphi 0, %s145
      %s147 = sphi 0, %s145
      %s148 = sphi 0, %s147
      %s162 = sphi 0, %s148
      %s166 = sphi 0, %s166
      %s168 = sphi 0, %s166
      %s169 = sphi 0, %s168
      %s183 = sphi 0, %s169
      %s187 = sphi 0, %s187
      %s189 = sphi 0, %s187
      %s190 = sphi 0, %s189
      %s204 = sphi 0, %s190
      %s208 = sphi 0, %s208
      %s210 = sphi 0, %s208
      %s211 = sphi 0, %s210
      %s225 = sphi 0, %s211
      %s231 = sphi 0, %s233
      %s234 = sphi 0, %s231
      %s235 = sphi 0, %s234
      %s251 = sphi 0, %s235
      %s257 = sphi 0, %s259
      %s260 = sphi 0, %s257
      %s261 = sphi 0, %s260
      %s277 = sphi 0, %s261
    $region4: #{tpu_custom_call.1} parent=1 // loop_header_branch
      %30 = sbr.rel (%p28) target = $region8
    $region5: #{tpu_custom_call.1} parent=1 // loop_body
      %s32 = ssub.s32 %s27, 1
      %s33 = ssub.s32 %s27, 2
      %s34 = sadd.s32 %s27, 1
      %s35 = ssub.s32 %s27, %s34
      %p36 = scmp.eq.s32.totalorder %s35, 0
      %s38 = sadd.s32 %s37, 1
      %s39 = scalar_select %p36, %s37, %s38
      %p42 = pneg %p36
      %p43 = scmp.eq.s32.totalorder %s27, 1
      %p44 = por %p42, %p43
      %p45 = scmp.ne.s32.totalorder %s37, %s40
      %p46 = scmp.eq.s32.totalorder %s27, 0
      %p47 = por %p45, %p46
      %p48 = scmp.ne.s32.totalorder %s37, %s40
      %p49 = scmp.eq.s32.totalorder %s32, 1
      %p50 = por %p48, %p49
      %p51 = scmp.ne.s32.totalorder %s40, %s41
      %p52 = scmp.eq.s32.totalorder %s32, 0
      %p53 = por %p51, %p52
      %p54 = scmp.ne.s32.totalorder %s40, %s41
      %p55 = scmp.eq.s32.totalorder %s33, 1
      %p56 = por %p54, %p55
      %p58 = scmp.ne.s32.totalorder %s41, %s57
      %p59 = scmp.eq.s32.totalorder %s33, 0
      %p60 = por %p58, %p59
      %s62 = sadd.s32 %s61, 1
      %p65 = scmp.eq.s32.totalorder %s27, 1
      %p66 = scmp.ne.s32.totalorder %s61, %s63
      %p67 = scmp.eq.s32.totalorder %s27, 0
      %p68 = por %p66, %p67
      %p69 = scmp.ne.s32.totalorder %s61, %s63
      %p70 = scmp.eq.s32.totalorder %s32, 1
      %p71 = por %p69, %p70
      %p72 = scmp.ne.s32.totalorder %s63, %s64
      %p73 = scmp.eq.s32.totalorder %s32, 0
      %p74 = por %p72, %p73
      %p75 = scmp.ne.s32.totalorder %s63, %s64
      %p76 = scmp.eq.s32.totalorder %s33, 1
      %p77 = por %p75, %p76
      %p79 = scmp.ne.s32.totalorder %s64, %s78
      %p80 = scmp.eq.s32.totalorder %s33, 0
      %p81 = por %p79, %p80
      %s83 = sadd.s32 %s82, 1
      %p86 = scmp.eq.s32.totalorder %s27, 1
      %p87 = scmp.ne.s32.totalorder %s82, %s84
      %p88 = scmp.eq.s32.totalorder %s27, 0
      %p89 = por %p87, %p88
      %p90 = scmp.ne.s32.totalorder %s82, %s84
      %p91 = scmp.eq.s32.totalorder %s32, 1
      %p92 = por %p90, %p91
      %p93 = scmp.ne.s32.totalorder %s84, %s85
      %p94 = scmp.eq.s32.totalorder %s32, 0
      %p95 = por %p93, %p94
      %p96 = scmp.ne.s32.totalorder %s84, %s85
      %p97 = scmp.eq.s32.totalorder %s33, 1
      %p98 = por %p96, %p97
      %p100 = scmp.ne.s32.totalorder %s85, %s99
      %p101 = scmp.eq.s32.totalorder %s33, 0
      %p102 = por %p100, %p101
      %s104 = sadd.s32 %s103, 1
      %p107 = scmp.eq.s32.totalorder %s27, 1
      %p108 = scmp.ne.s32.totalorder %s103, %s105
      %p109 = scmp.eq.s32.totalorder %s27, 0
      %p110 = por %p108, %p109
      %p111 = scmp.ne.s32.totalorder %s103, %s105
      %p112 = scmp.eq.s32.totalorder %s32, 1
      %p113 = por %p111, %p112
      %p114 = scmp.ne.s32.totalorder %s105, %s106
      %p115 = scmp.eq.s32.totalorder %s32, 0
      %p116 = por %p114, %p115
      %p117 = scmp.ne.s32.totalorder %s105, %s106
      %p118 = scmp.eq.s32.totalorder %s33, 1
      %p119 = por %p117, %p118
      %p121 = scmp.ne.s32.totalorder %s106, %s120
      %p122 = scmp.eq.s32.totalorder %s33, 0
      %p123 = por %p121, %p122
      %s125 = sadd.s32 %s124, 1
      %p128 = scmp.eq.s32.totalorder %s27, 1
      %p129 = scmp.ne.s32.totalorder %s124, %s126
      %p130 = scmp.eq.s32.totalorder %s27, 0
      %p131 = por %p129, %p130
      %p132 = scmp.ne.s32.totalorder %s124, %s126
      %p133 = scmp.eq.s32.totalorder %s32, 1
      %p134 = por %p132, %p133
      %p135 = scmp.ne.s32.totalorder %s126, %s127
      %p136 = scmp.eq.s32.totalorder %s32, 0
      %p137 = por %p135, %p136
      %p138 = scmp.ne.s32.totalorder %s126, %s127
      %p139 = scmp.eq.s32.totalorder %s33, 1
      %p140 = por %p138, %p139
      %p142 = scmp.ne.s32.totalorder %s127, %s141
      %p143 = scmp.eq.s32.totalorder %s33, 0
      %p144 = por %p142, %p143
      %s146 = sadd.s32 %s145, 1
      %p149 = scmp.eq.s32.totalorder %s27, 1
      %p150 = scmp.ne.s32.totalorder %s145, %s147
      %p151 = scmp.eq.s32.totalorder %s27, 0
      %p152 = por %p150, %p151
      %p153 = scmp.ne.s32.totalorder %s145, %s147
      %p154 = scmp.eq.s32.totalorder %s32, 1
      %p155 = por %p153, %p154
      %p156 = scmp.ne.s32.totalorder %s147, %s148
      %p157 = scmp.eq.s32.totalorder %s32, 0
      %p158 = por %p156, %p157
      %p159 = scmp.ne.s32.totalorder %s147, %s148
      %p160 = scmp.eq.s32.totalorder %s33, 1
      %p161 = por %p159, %p160
      %p163 = scmp.ne.s32.totalorder %s148, %s162
      %p164 = scmp.eq.s32.totalorder %s33, 0
      %p165 = por %p163, %p164
      %s167 = sadd.s32 %s166, 1
      %p170 = scmp.eq.s32.totalorder %s27, 1
      %p171 = scmp.ne.s32.totalorder %s166, %s168
      %p172 = scmp.eq.s32.totalorder %s27, 0
      %p173 = por %p171, %p172
      %p174 = scmp.ne.s32.totalorder %s166, %s168
      %p175 = scmp.eq.s32.totalorder %s32, 1
      %p176 = por %p174, %p175
      %p177 = scmp.ne.s32.totalorder %s168, %s169
      %p178 = scmp.eq.s32.totalorder %s32, 0
      %p179 = por %p177, %p178
      %p180 = scmp.ne.s32.totalorder %s168, %s169
      %p181 = scmp.eq.s32.totalorder %s33, 1
      %p182 = por %p180, %p181
      %p184 = scmp.ne.s32.totalorder %s169, %s183
      %p185 = scmp.eq.s32.totalorder %s33, 0
      %p186 = por %p184, %p185
      %s188 = sadd.s32 %s187, 1
      %p191 = scmp.eq.s32.totalorder %s27, 1
      %p192 = scmp.ne.s32.totalorder %s187, %s189
      %p193 = scmp.eq.s32.totalorder %s27, 0
      %p194 = por %p192, %p193
      %p195 = scmp.ne.s32.totalorder %s187, %s189
      %p196 = scmp.eq.s32.totalorder %s32, 1
      %p197 = por %p195, %p196
      %p198 = scmp.ne.s32.totalorder %s189, %s190
      %p199 = scmp.eq.s32.totalorder %s32, 0
      %p200 = por %p198, %p199
      %p201 = scmp.ne.s32.totalorder %s189, %s190
      %p202 = scmp.eq.s32.totalorder %s33, 1
      %p203 = por %p201, %p202
      %p205 = scmp.ne.s32.totalorder %s190, %s204
      %p206 = scmp.eq.s32.totalorder %s33, 0
      %p207 = por %p205, %p206
      %s209 = sadd.s32 %s208, 1
      %p212 = scmp.eq.s32.totalorder %s27, 1
      %p213 = scmp.ne.s32.totalorder %s208, %s210
      %p214 = scmp.eq.s32.totalorder %s27, 0
      %p215 = por %p213, %p214
      %p216 = scmp.ne.s32.totalorder %s208, %s210
      %p217 = scmp.eq.s32.totalorder %s32, 1
      %p218 = por %p216, %p217
      %p219 = scmp.ne.s32.totalorder %s210, %s211
      %p220 = scmp.eq.s32.totalorder %s32, 0
      %p221 = por %p219, %p220
      %p222 = scmp.ne.s32.totalorder %s210, %s211
      %p223 = scmp.eq.s32.totalorder %s33, 1
      %p224 = por %p222, %p223
      %p226 = scmp.ne.s32.totalorder %s211, %s225
      %p227 = scmp.eq.s32.totalorder %s33, 0
      %p228 = por %p226, %p227
      %s229 = ssub.s32 %s27, %s34
      %p230 = scmp.eq.s32.totalorder %s229, 0
      %s232 = sadd.s32 %s231, 1
      %s233 = scalar_select %p230, %s231, %s232
      %p236 = pneg %p230
      %p237 = scmp.eq.s32.totalorder %s27, 1
      %p238 = por %p236, %p237
      %p239 = scmp.ne.s32.totalorder %s231, %s234
      %p240 = scmp.eq.s32.totalorder %s27, 0
      %p241 = por %p239, %p240
      %p242 = scmp.ne.s32.totalorder %s231, %s234
      %p243 = scmp.eq.s32.totalorder %s32, 1
      %p244 = por %p242, %p243
      %p245 = scmp.ne.s32.totalorder %s234, %s235
      %p246 = scmp.eq.s32.totalorder %s32, 0
      %p247 = por %p245, %p246
      %p248 = scmp.ne.s32.totalorder %s234, %s235
      %p249 = scmp.eq.s32.totalorder %s33, 1
      %p250 = por %p248, %p249
      %p252 = scmp.ne.s32.totalorder %s235, %s251
      %p253 = scmp.eq.s32.totalorder %s33, 0
      %p254 = por %p252, %p253
      %s255 = ssub.s32 %s27, %s34
      %p256 = scmp.eq.s32.totalorder %s255, 0
      %s258 = sadd.s32 %s257, 1
      %s259 = scalar_select %p256, %s257, %s258
      %p262 = pneg %p256
      %p263 = scmp.eq.s32.totalorder %s27, 1
      %p264 = por %p262, %p263
      %p265 = scmp.ne.s32.totalorder %s257, %s260
      %p266 = scmp.eq.s32.totalorder %s27, 0
      %p267 = por %p265, %p266
      %p268 = scmp.ne.s32.totalorder %s257, %s260
      %p269 = scmp.eq.s32.totalorder %s32, 1
      %p270 = por %p268, %p269
      %p271 = scmp.ne.s32.totalorder %s260, %s261
      %p272 = scmp.eq.s32.totalorder %s32, 0
      %p273 = por %p271, %p272
      %p274 = scmp.ne.s32.totalorder %s260, %s261
      %p275 = scmp.eq.s32.totalorder %s33, 1
      %p276 = por %p274, %p275
      %p278 = scmp.ne.s32.totalorder %s261, %s277
      %p279 = scmp.eq.s32.totalorder %s33, 0
      %p280 = por %p278, %p279
      %p281 = scmp.le.s32.totalorder 1, %s27
      %p282 = scmp.lt.s32.totalorder %s27, 3
      %p283 = pnand %p281, %p282
      %p284 = pneg %p283
      // Predicated region
      $region9: #{tpu_custom_call.1} parent=5 // pred_check
        _
      $region10: #{tpu_custom_call.1} parent=5 // pred_check_branch
        %286 = sbr.rel (%p283) target = $region12
      $region11: #{tpu_custom_call.1} parent=5 // pred_region
        %s287 = ssub.s32 %s27, 1
        // Predicated region
        $region13: #{tpu_custom_call.1} parent=11 // pred_check
          %p288 = pneg %p74
        $region14: #{tpu_custom_call.1} parent=11 // pred_check_branch
          %290 = sbr.rel (%p288) target = $region16
        $region15: #{tpu_custom_call.1} parent=11 // pred_region
          _
        $region16: #{tpu_custom_call.1} parent=11 // pred_fallthru
          _
        // Predicated region
        $region17: #{tpu_custom_call.1} parent=11 // pred_check
          %p291 = pneg %p95
        $region18: #{tpu_custom_call.1} parent=11 // pred_check_branch
          %293 = sbr.rel (%p291) target = $region20
        $region19: #{tpu_custom_call.1} parent=11 // pred_region
          _
        $region20: #{tpu_custom_call.1} parent=11 // pred_fallthru
          _
        // Predicated region
        $region21: #{tpu_custom_call.1} parent=11 // pred_check
          %p294 = pneg %p116
        $region22: #{tpu_custom_call.1} parent=11 // pred_check_branch
          %296 = sbr.rel (%p294) target = $region24
        $region23: #{tpu_custom_call.1} parent=11 // pred_region
          _
        $region24: #{tpu_custom_call.1} parent=11 // pred_fallthru
          _
        // Predicated region
        $region25: #{tpu_custom_call.1} parent=11 // pred_check
          %p297 = pneg %p137
        $region26: #{tpu_custom_call.1} parent=11 // pred_check_branch
          %299 = sbr.rel (%p297) target = $region28
        $region27: #{tpu_custom_call.1} parent=11 // pred_region
          _
        $region28: #{tpu_custom_call.1} parent=11 // pred_fallthru
          _
        // Predicated region
        $region29: #{tpu_custom_call.1} parent=11 // pred_check
          %p300 = pneg %p158
        $region30: #{tpu_custom_call.1} parent=11 // pred_check_branch
          %302 = sbr.rel (%p300) target = $region32
        $region31: #{tpu_custom_call.1} parent=11 // pred_region
          %s304 = ssub.s32 2048, 2048
          %305 = vsyncadd [#allocation6], %s304
          %s306 = sshll.u32 [#allocation5], 4
          %s307 = int_to_ptr.vmem [resolvable:$true] %s306
          %312 = dma.hbm_to_vmem [thread:$0]  %s5, 2048, %s307, [#allocation6], 128, 128, 8
        $region32: #{tpu_custom_call.1} parent=11 // pred_fallthru
          _
        // Predicated region
        $region33: #{tpu_custom_call.1} parent=11 // pred_check
          %p313 = pneg %p179
        $region34: #{tpu_custom_call.1} parent=11 // pred_check_branch
          %315 = sbr.rel (%p313) target = $region36
        $region35: #{tpu_custom_call.1} parent=11 // pred_region
          _
        $region36: #{tpu_custom_call.1} parent=11 // pred_fallthru
          _
        // Predicated region
        $region37: #{tpu_custom_call.1} parent=11 // pred_check
          %p316 = pneg %p200
        $region38: #{tpu_custom_call.1} parent=11 // pred_check_branch
          %318 = sbr.rel (%p316) target = $region40
        $region39: #{tpu_custom_call.1} parent=11 // pred_region
          %s320 = ssub.s32 2048, 2048
          %321 = vsyncadd [#allocation6], %s320
          %s322 = sshll.u32 [#allocation7], 4
          %s323 = int_to_ptr.vmem [resolvable:$true] %s322
          %328 = dma.hbm_to_vmem [thread:$0]  %s7, 2048, %s323, [#allocation6], 128, 128, 8
        $region40: #{tpu_custom_call.1} parent=11 // pred_fallthru
          _
        // Predicated region
        $region41: #{tpu_custom_call.1} parent=11 // pred_check
          %p329 = pneg %p221
        $region42: #{tpu_custom_call.1} parent=11 // pred_check_branch
          %331 = sbr.rel (%p329) target = $region44
        $region43: #{tpu_custom_call.1} parent=11 // pred_region
          _
        $region44: #{tpu_custom_call.1} parent=11 // pred_fallthru
          _
      $region12: #{tpu_custom_call.1} parent=5 // pred_fallthru
        _
      %p332 = scmp.lt.s32.totalorder %s27, 2
      // Predicated region
      $region45: #{tpu_custom_call.1} parent=5 // pred_check
        %p333 = pneg %p332
      $region46: #{tpu_custom_call.1} parent=5 // pred_check_branch
        %335 = sbr.rel (%p333) target = $region48
      $region47: #{tpu_custom_call.1} parent=5 // pred_region
        // Predicated region
        $region49: #{tpu_custom_call.1} parent=47 // pred_check
          %p336 = pneg %p47
        $region50: #{tpu_custom_call.1} parent=47 // pred_check_branch
          %338 = sbr.rel (%p336) target = $region52
        $region51: #{tpu_custom_call.1} parent=47 // pred_region
          %s339 = sand.u32 %s37, 1
          %s340 = scalar_lea.sflag [#allocation3], %s339
          %s341 = sand.u32 %s37, 1
          %s342 = smul.addr %s341, 64
          %s343 = scalar_lea.vmem [#allocation2], %s342
          %s345 = ssub.s32 1024, 1024
          %346 = vsyncadd %s340, %s345
          %s347 = smul.addr %s27, 16
          %s348 = smul.addr %s347, 64
          %s349 = scalar_lea.hbm %s0, %s348
          %s350 = sshll.u32 %s343, 4
          %s351 = int_to_ptr.vmem [resolvable:$true] %s350
          %356 = dma.hbm_to_vmem [thread:$0]  %s349, 1024, %s351, %s340, 64, 64, 4
        $region52: #{tpu_custom_call.1} parent=47 // pred_fallthru
          _
      $region48: #{tpu_custom_call.1} parent=5 // pred_fallthru
        _
      %p357 = scmp.le.s32.totalorder 1, %s27
      %p358 = scmp.lt.s32.totalorder %s27, 3
      %p359 = pnand %p357, %p358
      %p360 = pneg %p359
      // Predicated region
      $region53: #{tpu_custom_call.1} parent=5 // pred_check
        _
      $region54: #{tpu_custom_call.1} parent=5 // pred_check_branch
        %362 = sbr.rel (%p359) target = $region56
      $region55: #{tpu_custom_call.1} parent=5 // pred_region
        %s363 = ssub.s32 %s27, 1
        %s364 = sand.u32 %s40, 1
        %s365 = scalar_lea.sflag [#allocation3], %s364
        %s366 = sand.u32 %s40, 1
        %s367 = smul.addr %s366, 64
        %s368 = scalar_lea.vmem [#allocation2], %s367
        // Predicated region
        $region57: #{tpu_custom_call.1} parent=55 // pred_check
          %p369 = pneg %p53
        $region58: #{tpu_custom_call.1} parent=55 // pred_check_branch
          %371 = sbr.rel (%p369) target = $region60
        $region59: #{tpu_custom_call.1} parent=55 // pred_region
          %372 = dma.done %s365, 1024
        $region60: #{tpu_custom_call.1} parent=55 // pred_fallthru
          _
        // Predicated region
        $region61: #{tpu_custom_call.1} parent=55 // pred_check
          %p373 = pneg %p158
        $region62: #{tpu_custom_call.1} parent=55 // pred_check_branch
          %375 = sbr.rel (%p373) target = $region64
        $region63: #{tpu_custom_call.1} parent=55 // pred_region
          %376 = dma.done [#allocation6], 2048
        $region64: #{tpu_custom_call.1} parent=55 // pred_fallthru
          _
        // Predicated region
        $region65: #{tpu_custom_call.1} parent=55 // pred_check
          %p377 = pneg %p200
        $region66: #{tpu_custom_call.1} parent=55 // pred_check_branch
          %379 = sbr.rel (%p377) target = $region68
        $region67: #{tpu_custom_call.1} parent=55 // pred_region
          %380 = dma.done [#allocation6], 2048
        $region68: #{tpu_custom_call.1} parent=55 // pred_fallthru
          _
        %s381 = sand.u32 %s40, 1
        %s382 = scalar_lea.sflag [#allocation3], %s381
        %s383 = sand.u32 %s40, 1
        %s384 = smul.addr %s383, 64
        %s385 = scalar_lea.vmem [#allocation2], %s384
        %p386 = pneg %p53
        %p387 = pneg %p50
        %p388 = pneg %p74
        %p389 = pneg %p71
        %p390 = pneg %p95
        %p391 = pneg %p92
        %p392 = pneg %p116
        %p393 = pneg %p113
        %p394 = pneg %p137
        %p395 = pneg %p134
        %p396 = pneg %p158
        %p397 = pneg %p155
        %p398 = pneg %p179
        %p399 = pneg %p176
        %p400 = pneg %p200
        %p401 = pneg %p197
        %p402 = pneg %p221
        %p403 = pneg %p218
        %p404 = pneg %p247
        %p405 = pneg %p244
        %s406 = sand.u32 %s234, 1
        %s407 = scalar_lea.sflag [#allocation4], %s406
        %s408 = sand.u32 %s234, 1
        %s409 = smul.addr %s408, 64
        %s410 = scalar_lea.vmem [#allocation8], %s409
        %p411 = pneg %p273
        %p412 = pneg %p270
        %s413 = sand.u32 %s260, 1
        %s414 = scalar_lea.sflag [#allocation10], %s413
        %s415 = sand.u32 %s260, 1
        %s416 = smul.addr %s415, 64
        %s417 = scalar_lea.vmem [#allocation9], %s416
        %v419 = vld [vmem:[%s368] sm:$0xf]
        %v420 = vld [vmem:[%s368 + $0x4] sm:$0xf]
        %v421 = vld [vmem:[%s368 + $0x8] sm:$0xf]
        %v422 = vld [vmem:[%s368 + $0xc] sm:$0xf]
        %v423 = vld [vmem:[%s368 + $0x10] sm:$0xf]
        %v424 = vld [vmem:[%s368 + $0x14] sm:$0xf]
        %v425 = vld [vmem:[%s368 + $0x18] sm:$0xf]
        %v426 = vld [vmem:[%s368 + $0x1c] sm:$0xf]
        %v427 = vld [vmem:[%s368 + $0x20] sm:$0xf]
        %v428 = vld [vmem:[%s368 + $0x24] sm:$0xf]
        %v429 = vld [vmem:[%s368 + $0x28] sm:$0xf]
        %v430 = vld [vmem:[%s368 + $0x2c] sm:$0xf]
        %v431 = vld [vmem:[%s368 + $0x30] sm:$0xf]
        %v432 = vld [vmem:[%s368 + $0x34] sm:$0xf]
        %v433 = vld [vmem:[%s368 + $0x38] sm:$0xf]
        %v434 = vld [vmem:[%s368 + $0x3c] sm:$0xf]
        %s435 = scalar_lea.vmem %s1, 1
        %v436 = vld [vmem:[%s435] sm:$0x1]
        %s437 = scalar_lea.vmem %s2, 1
        %v438 = vld [vmem:[%s437] sm:$0x1]
        %v439 = vunpack.c.l.bf16 %v419
        %v440 = vunpack.c.l.bf16 %v420
        %v441 = vunpack.c.l.bf16 %v421
        %v442 = vunpack.c.l.bf16 %v422
        %v443 = vunpack.c.l.bf16 %v423
        %v444 = vunpack.c.l.bf16 %v424
        %v445 = vunpack.c.l.bf16 %v425
        %v446 = vunpack.c.l.bf16 %v426
        %v447 = vunpack.c.l.bf16 %v427
        %v448 = vunpack.c.l.bf16 %v428
        %v449 = vunpack.c.l.bf16 %v429
        %v450 = vunpack.c.l.bf16 %v430
        %v451 = vunpack.c.l.bf16 %v431
        %v452 = vunpack.c.l.bf16 %v432
        %v453 = vunpack.c.l.bf16 %v433
        %v454 = vunpack.c.l.bf16 %v434
        %455 = vadd.xlane.f32.xlu0 %v439
        %v456 = vpop.xlane.xlu0 %455
        %457 = vadd.xlane.f32.xlu0 %v440
        %v458 = vpop.xlane.xlu0 %457
        %459 = vadd.xlane.f32.xlu0 %v441
        %v460 = vpop.xlane.xlu0 %459
        %461 = vadd.xlane.f32.xlu0 %v442
        %v462 = vpop.xlane.xlu0 %461
        %463 = vadd.xlane.f32.xlu0 %v443
        %v464 = vpop.xlane.xlu0 %463
        %465 = vadd.xlane.f32.xlu0 %v444
        %v466 = vpop.xlane.xlu0 %465
        %467 = vadd.xlane.f32.xlu0 %v445
        %v468 = vpop.xlane.xlu0 %467
        %469 = vadd.xlane.f32.xlu0 %v446
        %v470 = vpop.xlane.xlu0 %469
        %471 = vadd.xlane.f32.xlu0 %v447
        %v472 = vpop.xlane.xlu0 %471
        %473 = vadd.xlane.f32.xlu0 %v448
        %v474 = vpop.xlane.xlu0 %473
        %475 = vadd.xlane.f32.xlu0 %v449
        %v476 = vpop.xlane.xlu0 %475
        %477 = vadd.xlane.f32.xlu0 %v450
        %v478 = vpop.xlane.xlu0 %477
        %479 = vadd.xlane.f32.xlu0 %v451
        %v480 = vpop.xlane.xlu0 %479
        %481 = vadd.xlane.f32.xlu0 %v452
        %v482 = vpop.xlane.xlu0 %481
        %483 = vadd.xlane.f32.xlu0 %v453
        %v484 = vpop.xlane.xlu0 %483
        %485 = vadd.xlane.f32.xlu0 %v454
        %v486 = vpop.xlane.xlu0 %485
        %v487 = vrcp.pop 128.0
        %v488 = vmul.f32 %v456, %v487
        %v489 = vmul.f32 %v458, %v487
        %v490 = vmul.f32 %v460, %v487
        %v491 = vmul.f32 %v462, %v487
        %v492 = vmul.f32 %v464, %v487
        %v493 = vmul.f32 %v466, %v487
        %v494 = vmul.f32 %v468, %v487
        %v495 = vmul.f32 %v470, %v487
        %v496 = vmul.f32 %v472, %v487
        %v497 = vmul.f32 %v474, %v487
        %v498 = vmul.f32 %v476, %v487
        %v499 = vmul.f32 %v478, %v487
        %v500 = vmul.f32 %v480, %v487
        %v501 = vmul.f32 %v482, %v487
        %v502 = vmul.f32 %v484, %v487
        %v503 = vmul.f32 %v486, %v487
        %v504 = vsub.f32 %v439, %v488
        %v505 = vsub.f32 %v440, %v489
        %v506 = vsub.f32 %v441, %v490
        %v507 = vsub.f32 %v442, %v491
        %v508 = vsub.f32 %v443, %v492
        %v509 = vsub.f32 %v444, %v493
        %v510 = vsub.f32 %v445, %v494
        %v511 = vsub.f32 %v446, %v495
        %v512 = vsub.f32 %v447, %v496
        %v513 = vsub.f32 %v448, %v497
        %v514 = vsub.f32 %v449, %v498
        %v515 = vsub.f32 %v450, %v499
        %v516 = vsub.f32 %v451, %v500
        %v517 = vsub.f32 %v452, %v501
        %v518 = vsub.f32 %v453, %v502
        %v519 = vsub.f32 %v454, %v503
        %v520 = vmul.f32 %v504, %v504
        %v521 = vmul.f32 %v505, %v505
        %v522 = vmul.f32 %v506, %v506
        %v523 = vmul.f32 %v507, %v507
        %v524 = vmul.f32 %v508, %v508
        %v525 = vmul.f32 %v509, %v509
        %v526 = vmul.f32 %v510, %v510
        %v527 = vmul.f32 %v511, %v511
        %v528 = vmul.f32 %v512, %v512
        %v529 = vmul.f32 %v513, %v513
        %v530 = vmul.f32 %v514, %v514
        %v531 = vmul.f32 %v515, %v515
        %v532 = vmul.f32 %v516, %v516
        %v533 = vmul.f32 %v517, %v517
        %v534 = vmul.f32 %v518, %v518
        %v535 = vmul.f32 %v519, %v519
        %536 = vadd.xlane.f32.xlu0 %v520
        %v537 = vpop.xlane.xlu0 %536
        %538 = vadd.xlane.f32.xlu0 %v521
        %v539 = vpop.xlane.xlu0 %538
        %540 = vadd.xlane.f32.xlu0 %v522
        %v541 = vpop.xlane.xlu0 %540
        %542 = vadd.xlane.f32.xlu0 %v523
        %v543 = vpop.xlane.xlu0 %542
        %544 = vadd.xlane.f32.xlu0 %v524
        %v545 = vpop.xlane.xlu0 %544
        %546 = vadd.xlane.f32.xlu0 %v525
        %v547 = vpop.xlane.xlu0 %546
        %548 = vadd.xlane.f32.xlu0 %v526
        %v549 = vpop.xlane.xlu0 %548
        %550 = vadd.xlane.f32.xlu0 %v527
        %v551 = vpop.xlane.xlu0 %550
        %552 = vadd.xlane.f32.xlu0 %v528
        %v553 = vpop.xlane.xlu0 %552
        %554 = vadd.xlane.f32.xlu0 %v529
        %v555 = vpop.xlane.xlu0 %554
        %556 = vadd.xlane.f32.xlu0 %v530
        %v557 = vpop.xlane.xlu0 %556
        %558 = vadd.xlane.f32.xlu0 %v531
        %v559 = vpop.xlane.xlu0 %558
        %560 = vadd.xlane.f32.xlu0 %v532
        %v561 = vpop.xlane.xlu0 %560
        %562 = vadd.xlane.f32.xlu0 %v533
        %v563 = vpop.xlane.xlu0 %562
        %564 = vadd.xlane.f32.xlu0 %v534
        %v565 = vpop.xlane.xlu0 %564
        %566 = vadd.xlane.f32.xlu0 %v535
        %v567 = vpop.xlane.xlu0 %566
        %v568 = vmul.f32 %v537, %v487
        %v569 = vmul.f32 %v539, %v487
        %v570 = vmul.f32 %v541, %v487
        %v571 = vmul.f32 %v543, %v487
        %v572 = vmul.f32 %v545, %v487
        %v573 = vmul.f32 %v547, %v487
        %v574 = vmul.f32 %v549, %v487
        %v575 = vmul.f32 %v551, %v487
        %v576 = vmul.f32 %v553, %v487
        %v577 = vmul.f32 %v555, %v487
        %v578 = vmul.f32 %v557, %v487
        %v579 = vmul.f32 %v559, %v487
        %v580 = vmul.f32 %v561, %v487
        %v581 = vmul.f32 %v563, %v487
        %v582 = vmul.f32 %v565, %v487
        %v583 = vmul.f32 %v567, %v487
        %v584 = vadd.f32 %v568, 1e-05
        %v585 = vadd.f32 %v569, 1e-05
        %v586 = vadd.f32 %v570, 1e-05
        %v587 = vadd.f32 %v571, 1e-05
        %v588 = vadd.f32 %v572, 1e-05
        %v589 = vadd.f32 %v573, 1e-05
        %v590 = vadd.f32 %v574, 1e-05
        %v591 = vadd.f32 %v575, 1e-05
        %v592 = vadd.f32 %v576, 1e-05
        %v593 = vadd.f32 %v577, 1e-05
        %v594 = vadd.f32 %v578, 1e-05
        %v595 = vadd.f32 %v579, 1e-05
        %v596 = vadd.f32 %v580, 1e-05
        %v597 = vadd.f32 %v581, 1e-05
        %v598 = vadd.f32 %v582, 1e-05
        %v599 = vadd.f32 %v583, 1e-05
        %v600 = vrsqrt.pop %v584
        %v601 = vrsqrt.pop %v585
        %v602 = vrsqrt.pop %v586
        %v603 = vrsqrt.pop %v587
        %v604 = vrsqrt.pop %v588
        %v605 = vrsqrt.pop %v589
        %v606 = vrsqrt.pop %v590
        %v607 = vrsqrt.pop %v591
        %v608 = vrsqrt.pop %v592
        %v609 = vrsqrt.pop %v593
        %v610 = vrsqrt.pop %v594
        %v611 = vrsqrt.pop %v595
        %v612 = vrsqrt.pop %v596
        %v613 = vrsqrt.pop %v597
        %v614 = vrsqrt.pop %v598
        %v615 = vrsqrt.pop %v599
        %v616 = vmul.f32 %v504, %v600
        %v617 = vmul.f32 %v505, %v601
        %v618 = vmul.f32 %v506, %v602
        %v619 = vmul.f32 %v507, %v603
        %v620 = vmul.f32 %v508, %v604
        %v621 = vmul.f32 %v509, %v605
        %v622 = vmul.f32 %v510, %v606
        %v623 = vmul.f32 %v511, %v607
        %v624 = vmul.f32 %v512, %v608
        %v625 = vmul.f32 %v513, %v609
        %v626 = vmul.f32 %v514, %v610
        %v627 = vmul.f32 %v515, %v611
        %v628 = vmul.f32 %v516, %v612
        %v629 = vmul.f32 %v517, %v613
        %v630 = vmul.f32 %v518, %v614
        %v631 = vmul.f32 %v519, %v615
        %v633 = vlaneseq
        %v634 = vshrl.u32 %v633, 7
        %v635 = vsub.s32 0, %v634
        %v636 = vrot.slane %v436, %v635
        %v638 = vmul.f32 %v616, %v636
        %v639 = vmul.f32 %v617, %v636
        %v640 = vmul.f32 %v618, %v636
        %v641 = vmul.f32 %v619, %v636
        %v642 = vmul.f32 %v620, %v636
        %v643 = vmul.f32 %v621, %v636
        %v644 = vmul.f32 %v622, %v636
        %v645 = vmul.f32 %v623, %v636
        %v646 = vmul.f32 %v624, %v636
        %v647 = vmul.f32 %v625, %v636
        %v648 = vmul.f32 %v626, %v636
        %v649 = vmul.f32 %v627, %v636
        %v650 = vmul.f32 %v628, %v636
        %v651 = vmul.f32 %v629, %v636
        %v652 = vmul.f32 %v630, %v636
        %v653 = vmul.f32 %v631, %v636
        %v655 = vlaneseq
        %v656 = vshrl.u32 %v655, 7
        %v657 = vsub.s32 0, %v656
        %v658 = vrot.slane %v438, %v657
        %v660 = vadd.f32 %v638, %v658
        %v661 = vadd.f32 %v639, %v658
        %v662 = vadd.f32 %v640, %v658
        %v663 = vadd.f32 %v641, %v658
        %v664 = vadd.f32 %v642, %v658
        %v665 = vadd.f32 %v643, %v658
        %v666 = vadd.f32 %v644, %v658
        %v667 = vadd.f32 %v645, %v658
        %v668 = vadd.f32 %v646, %v658
        %v669 = vadd.f32 %v647, %v658
        %v670 = vadd.f32 %v648, %v658
        %v671 = vadd.f32 %v649, %v658
        %v672 = vadd.f32 %v650, %v658
        %v673 = vadd.f32 %v651, %v658
        %v674 = vadd.f32 %v652, %v658
        %v675 = vadd.f32 %v653, %v658
        %v676 = vpack.c.bf16 %v661, %v660
        %v677 = vpack.c.bf16 %v663, %v662
        %v678 = vpack.c.bf16 %v665, %v664
        %v679 = vpack.c.bf16 %v667, %v666
        %v680 = vpack.c.bf16 %v669, %v668
        %v681 = vpack.c.bf16 %v671, %v670
        %v682 = vpack.c.bf16 %v673, %v672
        %v683 = vpack.c.bf16 %v675, %v674
        %v684 = vld [vmem:[%s3] sm:$0xff]
        %v685 = vld [vmem:[%s3 + $0x8] sm:$0xff]
        %v686 = vld [vmem:[%s3 + $0x10] sm:$0xff]
        %v687 = vld [vmem:[%s3 + $0x18] sm:$0xff]
        %v688 = vld [vmem:[%s3 + $0x20] sm:$0xff]
        %v689 = vld [vmem:[%s3 + $0x28] sm:$0xff]
        %v690 = vld [vmem:[%s3 + $0x30] sm:$0xff]
        %v691 = vld [vmem:[%s3 + $0x38] sm:$0xff]
        %v692 = vld [vmem:[%s3 + $0x40] sm:$0xff]
        %v693 = vld [vmem:[%s3 + $0x48] sm:$0xff]
        %v694 = vld [vmem:[%s3 + $0x50] sm:$0xff]
        %v695 = vld [vmem:[%s3 + $0x58] sm:$0xff]
        %v696 = vld [vmem:[%s3 + $0x60] sm:$0xff]
        %v697 = vld [vmem:[%s3 + $0x68] sm:$0xff]
        %v698 = vld [vmem:[%s3 + $0x70] sm:$0xff]
        %v699 = vld [vmem:[%s3 + $0x78] sm:$0xff]
        %v700 = vld [vmem:[%s3 + $0x80] sm:$0xff]
        %v701 = vld [vmem:[%s3 + $0x88] sm:$0xff]
        %v702 = vld [vmem:[%s3 + $0x90] sm:$0xff]
        %v703 = vld [vmem:[%s3 + $0x98] sm:$0xff]
        %v704 = vld [vmem:[%s3 + $0xa0] sm:$0xff]
        %v705 = vld [vmem:[%s3 + $0xa8] sm:$0xff]
        %v706 = vld [vmem:[%s3 + $0xb0] sm:$0xff]
        %v707 = vld [vmem:[%s3 + $0xb8] sm:$0xff]
        %v708 = vld [vmem:[%s3 + $0xc0] sm:$0xff]
        %v709 = vld [vmem:[%s3 + $0xc8] sm:$0xff]
        %v710 = vld [vmem:[%s3 + $0xd0] sm:$0xff]
        %v711 = vld [vmem:[%s3 + $0xd8] sm:$0xff]
        %v712 = vld [vmem:[%s3 + $0xe0] sm:$0xff]
        %v713 = vld [vmem:[%s3 + $0xe8] sm:$0xff]
        %v714 = vld [vmem:[%s3 + $0xf0] sm:$0xff]
        %v715 = vld [vmem:[%s3 + $0xf8] sm:$0xff]
        %v716 = vld [vmem:[%s4] sm:$0xf]
        %v718 = vlaneseq
        %v719 = vshrl.u32 %v718, 7
        %v720 = vsub.s32 0, %v719
        %v721 = vrot.slane %v716, %v720
        %v722 = vlaneseq
        %v723 = vshrl.u32 %v722, 7
        %v724 = vsub.s32 1, %v723
        %v725 = vrot.slane %v716, %v724
        %v726 = vlaneseq
        %v727 = vshrl.u32 %v726, 7
        %v728 = vsub.s32 2, %v727
        %v729 = vrot.slane %v716, %v728
        %v730 = vlaneseq
        %v731 = vshrl.u32 %v730, 7
        %v732 = vsub.s32 3, %v731
        %v733 = vrot.slane %v716, %v732
        %v770 = vunpack.c.l.b16 %v684
        %v771 = vunpack.c.h.b16 %v684
        %v772 = vunpack.c.l.b16 %v685
        %v773 = vunpack.c.h.b16 %v685
        %v774 = vunpack.c.l.b16 %v686
        %v775 = vunpack.c.h.b16 %v686
        %v776 = vunpack.c.l.b16 %v687
        %v777 = vunpack.c.h.b16 %v687
        %v778 = vunpack.c.l.b16 %v688
        %v779 = vunpack.c.h.b16 %v688
        %v780 = vunpack.c.l.b16 %v689
        %v781 = vunpack.c.h.b16 %v689
        %v782 = vunpack.c.l.b16 %v690
        %v783 = vunpack.c.h.b16 %v690
        %v784 = vunpack.c.l.b16 %v691
        %v785 = vunpack.c.h.b16 %v691
        %v786 = vunpack.c.l.b16 %v692
        %v787 = vunpack.c.h.b16 %v692
        %v788 = vunpack.c.l.b16 %v693
        %v789 = vunpack.c.h.b16 %v693
        %v790 = vunpack.c.l.b16 %v694
        %v791 = vunpack.c.h.b16 %v694
        %v792 = vunpack.c.l.b16 %v695
        %v793 = vunpack.c.h.b16 %v695
        %v794 = vunpack.c.l.b16 %v696
        %v795 = vunpack.c.h.b16 %v696
        %v796 = vunpack.c.l.b16 %v697
        %v797 = vunpack.c.h.b16 %v697
        %v798 = vunpack.c.l.b16 %v698
        %v799 = vunpack.c.h.b16 %v698
        %v800 = vunpack.c.l.b16 %v699
        %v801 = vunpack.c.h.b16 %v699
        %v802 = vunpack.c.l.b16 %v700
        %v803 = vunpack.c.h.b16 %v700
        %v804 = vunpack.c.l.b16 %v701
        %v805 = vunpack.c.h.b16 %v701
        %v806 = vunpack.c.l.b16 %v702
        %v807 = vunpack.c.h.b16 %v702
        %v808 = vunpack.c.l.b16 %v703
        %v809 = vunpack.c.h.b16 %v703
        %v810 = vunpack.c.l.b16 %v704
        %v811 = vunpack.c.h.b16 %v704
        %v812 = vunpack.c.l.b16 %v705
        %v813 = vunpack.c.h.b16 %v705
        %v814 = vunpack.c.l.b16 %v706
        %v815 = vunpack.c.h.b16 %v706
        %v816 = vunpack.c.l.b16 %v707
        %v817 = vunpack.c.h.b16 %v707
        %v818 = vunpack.c.l.b16 %v708
        %v819 = vunpack.c.h.b16 %v708
        %v820 = vunpack.c.l.b16 %v709
        %v821 = vunpack.c.h.b16 %v709
        %v822 = vunpack.c.l.b16 %v710
        %v823 = vunpack.c.h.b16 %v710
        %v824 = vunpack.c.l.b16 %v711
        %v825 = vunpack.c.h.b16 %v711
        %v826 = vunpack.c.l.b16 %v712
        %v827 = vunpack.c.h.b16 %v712
        %v828 = vunpack.c.l.b16 %v713
        %v829 = vunpack.c.h.b16 %v713
        %v830 = vunpack.c.l.b16 %v714
        %v831 = vunpack.c.h.b16 %v714
        %v832 = vunpack.c.l.b16 %v715
        %v833 = vunpack.c.h.b16 %v715
        %v834 = vpack.c.b16 %v774, %v770
        %v835 = vpack.c.b16 %v775, %v771
        %v836 = vpack.c.b16 %v776, %v772
        %v837 = vpack.c.b16 %v777, %v773
        %v838 = vpack.c.b16 %v782, %v778
        %v839 = vpack.c.b16 %v783, %v779
        %v840 = vpack.c.b16 %v784, %v780
        %v841 = vpack.c.b16 %v785, %v781
        %v842 = vpack.c.b16 %v790, %v786
        %v843 = vpack.c.b16 %v791, %v787
        %v844 = vpack.c.b16 %v792, %v788
        %v845 = vpack.c.b16 %v793, %v789
        %v846 = vpack.c.b16 %v798, %v794
        %v847 = vpack.c.b16 %v799, %v795
        %v848 = vpack.c.b16 %v800, %v796
        %v849 = vpack.c.b16 %v801, %v797
        %v850 = vpack.c.b16 %v806, %v802
        %v851 = vpack.c.b16 %v807, %v803
        %v852 = vpack.c.b16 %v808, %v804
        %v853 = vpack.c.b16 %v809, %v805
        %v854 = vpack.c.b16 %v814, %v810
        %v855 = vpack.c.b16 %v815, %v811
        %v856 = vpack.c.b16 %v816, %v812
        %v857 = vpack.c.b16 %v817, %v813
        %v858 = vpack.c.b16 %v822, %v818
        %v859 = vpack.c.b16 %v823, %v819
        %v860 = vpack.c.b16 %v824, %v820
        %v861 = vpack.c.b16 %v825, %v821
        %v862 = vpack.c.b16 %v830, %v826
        %v863 = vpack.c.b16 %v831, %v827
        %v864 = vpack.c.b16 %v832, %v828
        %v865 = vpack.c.b16 %v833, %v829
        %898 = vmatprep.subr.bf16.mxu0 %v835
        %899 = vmatpush1.bf16.msra.mxu0 %v834
        %900 = vmatprep.subr.bf16.mxu0 %v839
        %901 = vmatpush1.bf16.msra.mxu0 %v838
        %902 = vmatprep.subr.bf16.mxu0 %v843
        %903 = vmatpush1.bf16.msra.mxu0 %v842
        %904 = vmatprep.subr.bf16.mxu0 %v847
        %905 = vmatpush1.bf16.msra.mxu0 %v846
        %906 = vmatprep.subr.bf16.mxu0 %v851
        %907 = vmatpush1.bf16.msra.mxu0 %v850
        %908 = vmatprep.subr.bf16.mxu0 %v855
        %909 = vmatpush1.bf16.msra.mxu0 %v854
        %910 = vmatprep.subr.bf16.mxu0 %v859
        %911 = vmatpush1.bf16.msra.mxu0 %v858
        %912 = vmatprep.subr.bf16.mxu0 %v863
        %913 = vmatpush1.bf16.msra.mxu0 %v862
        %914 = vmatprep.subr.bf16.mxu0 0
        %915 = vmatpush1.bf16.msra.mxu0 0
        %916 = vmatprep.subr.bf16.mxu0 0
        %917 = vmatpush1.bf16.msra.mxu0 0
        %918 = vmatprep.subr.bf16.mxu0 0
        %919 = vmatpush1.bf16.msra.mxu0 0
        %920 = vmatprep.subr.bf16.mxu0 0
        %921 = vmatpush1.bf16.msra.mxu0 0
        %922 = vmatprep.subr.bf16.mxu0 0
        %923 = vmatpush1.bf16.msra.mxu0 0
        %924 = vmatprep.subr.bf16.mxu0 0
        %925 = vmatpush1.bf16.msra.mxu0 0
        %926 = vmatprep.subr.bf16.mxu0 0
        %927 = vmatpush1.bf16.msra.mxu0 0
        %928 = vmatprep.subr.bf16.mxu0 0
        %929 = vmatpush1.bf16.msra.mxu0 0
        %930 = vmatprep.mubr.bf16.mxu0 0
        %931 = vmatmul.mubr.bf16.gmra.mrb[0].mxu0 %v676
        %v932 = vpop.f32.mrb[0].mxu0
        %v933 = vadd.f32 %v721, %v932
        %v934 = vpop.f32.mrb[0].mxu0
        %v935 = vadd.f32 %v725, %v934
        %v936 = vpop.f32.mrb[0].mxu0
        %v937 = vadd.f32 %v721, %v936
        %v938 = vpop.f32.mrb[0].mxu0
        %v939 = vadd.f32 %v725, %v938
        %940 = vmatprep.mubr.bf16.mxu0 0
        %941 = vmatmul.mubr.bf16.gmra.mrb[0].mxu0 %v677
        %v942 = vpop.f32.mrb[0].mxu0
        %v943 = vadd.f32 %v721, %v942
        %v944 = vpop.f32.mrb[0].mxu0
        %v945 = vadd.f32 %v725, %v944
        %v946 = vpop.f32.mrb[0].mxu0
        %v947 = vadd.f32 %v721, %v946
        %v948 = vpop.f32.mrb[0].mxu0
        %v949 = vadd.f32 %v725, %v948
        %950 = vmatprep.mubr.bf16.mxu0 0
        %951 = vmatmul.mubr.bf16.gmra.mrb[0].mxu0 %v678
        %v952 = vpop.f32.mrb[0].mxu0
        %v953 = vadd.f32 %v721, %v952
        %v954 = vpop.f32.mrb[0].mxu0
        %v955 = vadd.f32 %v725, %v954
        %v956 = vpop.f32.mrb[0].mxu0
        %v957 = vadd.f32 %v721, %v956
        %v958 = vpop.f32.mrb[0].mxu0
        %v959 = vadd.f32 %v725, %v958
        %960 = vmatprep.mubr.bf16.mxu0 0
        %961 = vmatmul.mubr.bf16.gmra.mrb[0].mxu0 %v679
        %v962 = vpop.f32.mrb[0].mxu0
        %v963 = vadd.f32 %v721, %v962
        %v964 = vpop.f32.mrb[0].mxu0
        %v965 = vadd.f32 %v725, %v964
        %v966 = vpop.f32.mrb[0].mxu0
        %v967 = vadd.f32 %v721, %v966
        %v968 = vpop.f32.mrb[0].mxu0
        %v969 = vadd.f32 %v725, %v968
        %970 = vmatprep.mubr.bf16.mxu0 0
        %971 = vmatmul.mubr.bf16.gmra.mrb[0].mxu0 %v680
        %v972 = vpop.f32.mrb[0].mxu0
        %v973 = vadd.f32 %v721, %v972
        %v974 = vpop.f32.mrb[0].mxu0
        %v975 = vadd.f32 %v725, %v974
        %v976 = vpop.f32.mrb[0].mxu0
        %v977 = vadd.f32 %v721, %v976
        %v978 = vpop.f32.mrb[0].mxu0
        %v979 = vadd.f32 %v725, %v978
        %980 = vmatprep.mubr.bf16.mxu0 0
        %981 = vmatmul.mubr.bf16.gmra.mrb[0].mxu0 %v681
        %v982 = vpop.f32.mrb[0].mxu0
        %v983 = vadd.f32 %v721, %v982
        %v984 = vpop.f32.mrb[0].mxu0
        %v985 = vadd.f32 %v725, %v984
        %v986 = vpop.f32.mrb[0].mxu0
        %v987 = vadd.f32 %v721, %v986
        %v988 = vpop.f32.mrb[0].mxu0
        %v989 = vadd.f32 %v725, %v988
        %990 = vmatprep.mubr.bf16.mxu0 0
        %991 = vmatmul.mubr.bf16.gmra.mrb[0].mxu0 %v682
        %v992 = vpop.f32.mrb[0].mxu0
        %v993 = vadd.f32 %v721, %v992
        %v994 = vpop.f32.mrb[0].mxu0
        %v995 = vadd.f32 %v725, %v994
        %v996 = vpop.f32.mrb[0].mxu0
        %v997 = vadd.f32 %v721, %v996
        %v998 = vpop.f32.mrb[0].mxu0
        %v999 = vadd.f32 %v725, %v998
        %1000 = vmatprep.mubr.bf16.mxu0 0
        %1001 = vmatmul.mubr.bf16.gmra.mrb[0].mxu0 %v683
        %v1002 = vpop.f32.mrb[0].mxu0
        %v1003 = vadd.f32 %v721, %v1002
        %v1004 = vpop.f32.mrb[0].mxu0
        %v1005 = vadd.f32 %v725, %v1004
        %v1006 = vpop.f32.mrb[0].mxu0
        %v1007 = vadd.f32 %v721, %v1006
        %v1008 = vpop.f32.mrb[0].mxu0
        %v1009 = vadd.f32 %v725, %v1008
        %1010 = vdwg.mxu0
        %1011 = vmatprep.subr.bf16.mxu0 %v837
        %1012 = vmatpush1.bf16.msra.mxu0 %v836
        %1013 = vmatprep.subr.bf16.mxu0 %v841
        %1014 = vmatpush1.bf16.msra.mxu0 %v840
        %1015 = vmatprep.subr.bf16.mxu0 %v845
        %1016 = vmatpush1.bf16.msra.mxu0 %v844
        %1017 = vmatprep.subr.bf16.mxu0 %v849
        %1018 = vmatpush1.bf16.msra.mxu0 %v848
        %1019 = vmatprep.subr.bf16.mxu0 %v853
        %1020 = vmatpush1.bf16.msra.mxu0 %v852
        %1021 = vmatprep.subr.bf16.mxu0 %v857
        %1022 = vmatpush1.bf16.msra.mxu0 %v856
        %1023 = vmatprep.subr.bf16.mxu0 %v861
        %1024 = vmatpush1.bf16.msra.mxu0 %v860
        %1025 = vmatprep.subr.bf16.mxu0 %v865
        %1026 = vmatpush1.bf16.msra.mxu0 %v864
        %1027 = vmatprep.subr.bf16.mxu0 0
        %1028 = vmatpush1.bf16.msra.mxu0 0
        %1029 = vmatprep.subr.bf16.mxu0 0
        %1030 = vmatpush1.bf16.msra.mxu0 0
        %1031 = vmatprep.subr.bf16.mxu0 0
        %1032 = vmatpush1.bf16.msra.mxu0 0
        %1033 = vmatprep.subr.bf16.mxu0 0
        %1034 = vmatpush1.bf16.msra.mxu0 0
        %1035 = vmatprep.subr.bf16.mxu0 0
        %1036 = vmatpush1.bf16.msra.mxu0 0
        %1037 = vmatprep.subr.bf16.mxu0 0
        %1038 = vmatpush1.bf16.msra.mxu0 0
        %1039 = vmatprep.subr.bf16.mxu0 0
        %1040 = vmatpush1.bf16.msra.mxu0 0
        %1041 = vmatprep.subr.bf16.mxu0 0
        %1042 = vmatpush1.bf16.msra.mxu0 0
        %1043 = vmatprep.mubr.bf16.mxu0 0
        %1044 = vmatmul.mubr.bf16.gmra.mrb[0].mxu0 %v676
        %v1045 = vpop.f32.mrb[0].mxu0
        %v1046 = vadd.f32 %v729, %v1045
        %v1047 = vpop.f32.mrb[0].mxu0
        %v1048 = vadd.f32 %v733, %v1047
        %v1049 = vpop.f32.mrb[0].mxu0
        %v1050 = vadd.f32 %v729, %v1049
        %v1051 = vpop.f32.mrb[0].mxu0
        %v1052 = vadd.f32 %v733, %v1051
        %1053 = vmatprep.mubr.bf16.mxu0 0
        %1054 = vmatmul.mubr.bf16.gmra.mrb[0].mxu0 %v677
        %v1055 = vpop.f32.mrb[0].mxu0
        %v1056 = vadd.f32 %v729, %v1055
        %v1057 = vpop.f32.mrb[0].mxu0
        %v1058 = vadd.f32 %v733, %v1057
        %v1059 = vpop.f32.mrb[0].mxu0
        %v1060 = vadd.f32 %v729, %v1059
        %v1061 = vpop.f32.mrb[0].mxu0
        %v1062 = vadd.f32 %v733, %v1061
        %1063 = vmatprep.mubr.bf16.mxu0 0
        %1064 = vmatmul.mubr.bf16.gmra.mrb[0].mxu0 %v678
        %v1065 = vpop.f32.mrb[0].mxu0
        %v1066 = vadd.f32 %v729, %v1065
        %v1067 = vpop.f32.mrb[0].mxu0
        %v1068 = vadd.f32 %v733, %v1067
        %v1069 = vpop.f32.mrb[0].mxu0
        %v1070 = vadd.f32 %v729, %v1069
        %v1071 = vpop.f32.mrb[0].mxu0
        %v1072 = vadd.f32 %v733, %v1071
        %1073 = vmatprep.mubr.bf16.mxu0 0
        %1074 = vmatmul.mubr.bf16.gmra.mrb[0].mxu0 %v679
        %v1075 = vpop.f32.mrb[0].mxu0
        %v1076 = vadd.f32 %v729, %v1075
        %v1077 = vpop.f32.mrb[0].mxu0
        %v1078 = vadd.f32 %v733, %v1077
        %v1079 = vpop.f32.mrb[0].mxu0
        %v1080 = vadd.f32 %v729, %v1079
        %v1081 = vpop.f32.mrb[0].mxu0
        %v1082 = vadd.f32 %v733, %v1081
        %1083 = vmatprep.mubr.bf16.mxu0 0
        %1084 = vmatmul.mubr.bf16.gmra.mrb[0].mxu0 %v680
        %v1085 = vpop.f32.mrb[0].mxu0
        %v1086 = vadd.f32 %v729, %v1085
        %v1087 = vpop.f32.mrb[0].mxu0
        %v1088 = vadd.f32 %v733, %v1087
        %v1089 = vpop.f32.mrb[0].mxu0
        %v1090 = vadd.f32 %v729, %v1089
        %v1091 = vpop.f32.mrb[0].mxu0
        %v1092 = vadd.f32 %v733, %v1091
        %1093 = vmatprep.mubr.bf16.mxu0 0
        %1094 = vmatmul.mubr.bf16.gmra.mrb[0].mxu0 %v681
        %v1095 = vpop.f32.mrb[0].mxu0
        %v1096 = vadd.f32 %v729, %v1095
        %v1097 = vpop.f32.mrb[0].mxu0
        %v1098 = vadd.f32 %v733, %v1097
        %v1099 = vpop.f32.mrb[0].mxu0
        %v1100 = vadd.f32 %v729, %v1099
        %v1101 = vpop.f32.mrb[0].mxu0
        %v1102 = vadd.f32 %v733, %v1101
        %1103 = vmatprep.mubr.bf16.mxu0 0
        %1104 = vmatmul.mubr.bf16.gmra.mrb[0].mxu0 %v682
        %v1105 = vpop.f32.mrb[0].mxu0
        %v1106 = vadd.f32 %v729, %v1105
        %v1107 = vpop.f32.mrb[0].mxu0
        %v1108 = vadd.f32 %v733, %v1107
        %v1109 = vpop.f32.mrb[0].mxu0
        %v1110 = vadd.f32 %v729, %v1109
        %v1111 = vpop.f32.mrb[0].mxu0
        %v1112 = vadd.f32 %v733, %v1111
        %1113 = vmatprep.mubr.bf16.mxu0 0
        %1114 = vmatmul.mubr.bf16.gmra.mrb[0].mxu0 %v683
        %v1115 = vpop.f32.mrb[0].mxu0
        %v1116 = vadd.f32 %v729, %v1115
        %v1117 = vpop.f32.mrb[0].mxu0
        %v1118 = vadd.f32 %v733, %v1117
        %v1119 = vpop.f32.mrb[0].mxu0
        %v1120 = vadd.f32 %v729, %v1119
        %v1121 = vpop.f32.mrb[0].mxu0
        %v1122 = vadd.f32 %v733, %v1121
        %1123 = vdwg.mxu0
        %v1124 = vmul.f32 %v933, 0.5
        %v1125 = vmul.f32 %v935, 0.5
        %v1126 = vmul.f32 %v1046, 0.5
        %v1127 = vmul.f32 %v1048, 0.5
        %v1128 = vmul.f32 %v937, 0.5
        %v1129 = vmul.f32 %v939, 0.5
        %v1130 = vmul.f32 %v1050, 0.5
        %v1131 = vmul.f32 %v1052, 0.5
        %v1132 = vmul.f32 %v943, 0.5
        %v1133 = vmul.f32 %v945, 0.5
        %v1134 = vmul.f32 %v1056, 0.5
        %v1135 = vmul.f32 %v1058, 0.5
        %v1136 = vmul.f32 %v947, 0.5
        %v1137 = vmul.f32 %v949, 0.5
        %v1138 = vmul.f32 %v1060, 0.5
        %v1139 = vmul.f32 %v1062, 0.5
        %v1140 = vmul.f32 %v953, 0.5
        %v1141 = vmul.f32 %v955, 0.5
        %v1142 = vmul.f32 %v1066, 0.5
        %v1143 = vmul.f32 %v1068, 0.5
        %v1144 = vmul.f32 %v957, 0.5
        %v1145 = vmul.f32 %v959, 0.5
        %v1146 = vmul.f32 %v1070, 0.5
        %v1147 = vmul.f32 %v1072, 0.5
        %v1148 = vmul.f32 %v963, 0.5
        %v1149 = vmul.f32 %v965, 0.5
        %v1150 = vmul.f32 %v1076, 0.5
        %v1151 = vmul.f32 %v1078, 0.5
        %v1152 = vmul.f32 %v967, 0.5
        %v1153 = vmul.f32 %v969, 0.5
        %v1154 = vmul.f32 %v1080, 0.5
        %v1155 = vmul.f32 %v1082, 0.5
        %v1156 = vmul.f32 %v973, 0.5
        %v1157 = vmul.f32 %v975, 0.5
        %v1158 = vmul.f32 %v1086, 0.5
        %v1159 = vmul.f32 %v1088, 0.5
        %v1160 = vmul.f32 %v977, 0.5
        %v1161 = vmul.f32 %v979, 0.5
        %v1162 = vmul.f32 %v1090, 0.5
        %v1163 = vmul.f32 %v1092, 0.5
        %v1164 = vmul.f32 %v983, 0.5
        %v1165 = vmul.f32 %v985, 0.5
        %v1166 = vmul.f32 %v1096, 0.5
        %v1167 = vmul.f32 %v1098, 0.5
        %v1168 = vmul.f32 %v987, 0.5
        %v1169 = vmul.f32 %v989, 0.5
        %v1170 = vmul.f32 %v1100, 0.5
        %v1171 = vmul.f32 %v1102, 0.5
        %v1172 = vmul.f32 %v993, 0.5
        %v1173 = vmul.f32 %v995, 0.5
        %v1174 = vmul.f32 %v1106, 0.5
        %v1175 = vmul.f32 %v1108, 0.5
        %v1176 = vmul.f32 %v997, 0.5
        %v1177 = vmul.f32 %v999, 0.5
        %v1178 = vmul.f32 %v1110, 0.5
        %v1179 = vmul.f32 %v1112, 0.5
        %v1180 = vmul.f32 %v1003, 0.5
        %v1181 = vmul.f32 %v1005, 0.5
        %v1182 = vmul.f32 %v1116, 0.5
        %v1183 = vmul.f32 %v1118, 0.5
        %v1184 = vmul.f32 %v1007, 0.5
        %v1185 = vmul.f32 %v1009, 0.5
        %v1186 = vmul.f32 %v1120, 0.5
        %v1187 = vmul.f32 %v1122, 0.5
        %v1188 = vmul.f32 %v933, 0.70710677
        %v1189 = vmul.f32 %v935, 0.70710677
        %v1190 = vmul.f32 %v1046, 0.70710677
        %v1191 = vmul.f32 %v1048, 0.70710677
        %v1192 = vmul.f32 %v937, 0.70710677
        %v1193 = vmul.f32 %v939, 0.70710677
        %v1194 = vmul.f32 %v1050, 0.70710677
        %v1195 = vmul.f32 %v1052, 0.70710677
        %v1196 = vmul.f32 %v943, 0.70710677
        %v1197 = vmul.f32 %v945, 0.70710677
        %v1198 = vmul.f32 %v1056, 0.70710677
        %v1199 = vmul.f32 %v1058, 0.70710677
        %v1200 = vmul.f32 %v947, 0.70710677
        %v1201 = vmul.f32 %v949, 0.70710677
        %v1202 = vmul.f32 %v1060, 0.70710677
        %v1203 = vmul.f32 %v1062, 0.70710677
        %v1204 = vmul.f32 %v953, 0.70710677
        %v1205 = vmul.f32 %v955, 0.70710677
        %v1206 = vmul.f32 %v1066, 0.70710677
        %v1207 = vmul.f32 %v1068, 0.70710677
        %v1208 = vmul.f32 %v957, 0.70710677
        %v1209 = vmul.f32 %v959, 0.70710677
        %v1210 = vmul.f32 %v1070, 0.70710677
        %v1211 = vmul.f32 %v1072, 0.70710677
        %v1212 = vmul.f32 %v963, 0.70710677
        %v1213 = vmul.f32 %v965, 0.70710677
        %v1214 = vmul.f32 %v1076, 0.70710677
        %v1215 = vmul.f32 %v1078, 0.70710677
        %v1216 = vmul.f32 %v967, 0.70710677
        %v1217 = vmul.f32 %v969, 0.70710677
        %v1218 = vmul.f32 %v1080, 0.70710677
        %v1219 = vmul.f32 %v1082, 0.70710677
        %v1220 = vmul.f32 %v973, 0.70710677
        %v1221 = vmul.f32 %v975, 0.70710677
        %v1222 = vmul.f32 %v1086, 0.70710677
        %v1223 = vmul.f32 %v1088, 0.70710677
        %v1224 = vmul.f32 %v977, 0.70710677
        %v1225 = vmul.f32 %v979, 0.70710677
        %v1226 = vmul.f32 %v1090, 0.70710677
        %v1227 = vmul.f32 %v1092, 0.70710677
        %v1228 = vmul.f32 %v983, 0.70710677
        %v1229 = vmul.f32 %v985, 0.70710677
        %v1230 = vmul.f32 %v1096, 0.70710677
        %v1231 = vmul.f32 %v1098, 0.70710677
        %v1232 = vmul.f32 %v987, 0.70710677
        %v1233 = vmul.f32 %v989, 0.70710677
        %v1234 = vmul.f32 %v1100, 0.70710677
        %v1235 = vmul.f32 %v1102, 0.70710677
        %v1236 = vmul.f32 %v993, 0.70710677
        %v1237 = vmul.f32 %v995, 0.70710677
        %v1238 = vmul.f32 %v1106, 0.70710677
        %v1239 = vmul.f32 %v1108, 0.70710677
        %v1240 = vmul.f32 %v997, 0.70710677
        %v1241 = vmul.f32 %v999, 0.70710677
        %v1242 = vmul.f32 %v1110, 0.70710677
        %v1243 = vmul.f32 %v1112, 0.70710677
        %v1244 = vmul.f32 %v1003, 0.70710677
        %v1245 = vmul.f32 %v1005, 0.70710677
        %v1246 = vmul.f32 %v1116, 0.70710677
        %v1247 = vmul.f32 %v1118, 0.70710677
        %v1248 = vmul.f32 %v1007, 0.70710677
        %v1249 = vmul.f32 %v1009, 0.70710677
        %v1250 = vmul.f32 %v1120, 0.70710677
        %v1251 = vmul.f32 %v1122, 0.70710677
        %v1252 = verf.f32.pop %v1188
        %v1253 = verf.f32.pop %v1189
        %v1254 = verf.f32.pop %v1190
        %v1255 = verf.f32.pop %v1191
        %v1256 = verf.f32.pop %v1192
        %v1257 = verf.f32.pop %v1193
        %v1258 = verf.f32.pop %v1194
        %v1259 = verf.f32.pop %v1195
        %v1260 = verf.f32.pop %v1196
        %v1261 = verf.f32.pop %v1197
        %v1262 = verf.f32.pop %v1198
        %v1263 = verf.f32.pop %v1199
        %v1264 = verf.f32.pop %v1200
        %v1265 = verf.f32.pop %v1201
        %v1266 = verf.f32.pop %v1202
        %v1267 = verf.f32.pop %v1203
        %v1268 = verf.f32.pop %v1204
        %v1269 = verf.f32.pop %v1205
        %v1270 = verf.f32.pop %v1206
        %v1271 = verf.f32.pop %v1207
        %v1272 = verf.f32.pop %v1208
        %v1273 = verf.f32.pop %v1209
        %v1274 = verf.f32.pop %v1210
        %v1275 = verf.f32.pop %v1211
        %v1276 = verf.f32.pop %v1212
        %v1277 = verf.f32.pop %v1213
        %v1278 = verf.f32.pop %v1214
        %v1279 = verf.f32.pop %v1215
        %v1280 = verf.f32.pop %v1216
        %v1281 = verf.f32.pop %v1217
        %v1282 = verf.f32.pop %v1218
        %v1283 = verf.f32.pop %v1219
        %v1284 = verf.f32.pop %v1220
        %v1285 = verf.f32.pop %v1221
        %v1286 = verf.f32.pop %v1222
        %v1287 = verf.f32.pop %v1223
        %v1288 = verf.f32.pop %v1224
        %v1289 = verf.f32.pop %v1225
        %v1290 = verf.f32.pop %v1226
        %v1291 = verf.f32.pop %v1227
        %v1292 = verf.f32.pop %v1228
        %v1293 = verf.f32.pop %v1229
        %v1294 = verf.f32.pop %v1230
        %v1295 = verf.f32.pop %v1231
        %v1296 = verf.f32.pop %v1232
        %v1297 = verf.f32.pop %v1233
        %v1298 = verf.f32.pop %v1234
        %v1299 = verf.f32.pop %v1235
        %v1300 = verf.f32.pop %v1236
        %v1301 = verf.f32.pop %v1237
        %v1302 = verf.f32.pop %v1238
        %v1303 = verf.f32.pop %v1239
        %v1304 = verf.f32.pop %v1240
        %v1305 = verf.f32.pop %v1241
        %v1306 = verf.f32.pop %v1242
        %v1307 = verf.f32.pop %v1243
        %v1308 = verf.f32.pop %v1244
        %v1309 = verf.f32.pop %v1245
        %v1310 = verf.f32.pop %v1246
        %v1311 = verf.f32.pop %v1247
        %v1312 = verf.f32.pop %v1248
        %v1313 = verf.f32.pop %v1249
        %v1314 = verf.f32.pop %v1250
        %v1315 = verf.f32.pop %v1251
        %v1316 = vadd.f32 %v1252, 1.0
        %v1317 = vadd.f32 %v1253, 1.0
        %v1318 = vadd.f32 %v1254, 1.0
        %v1319 = vadd.f32 %v1255, 1.0
        %v1320 = vadd.f32 %v1256, 1.0
        %v1321 = vadd.f32 %v1257, 1.0
        %v1322 = vadd.f32 %v1258, 1.0
        %v1323 = vadd.f32 %v1259, 1.0
        %v1324 = vadd.f32 %v1260, 1.0
        %v1325 = vadd.f32 %v1261, 1.0
        %v1326 = vadd.f32 %v1262, 1.0
        %v1327 = vadd.f32 %v1263, 1.0
        %v1328 = vadd.f32 %v1264, 1.0
        %v1329 = vadd.f32 %v1265, 1.0
        %v1330 = vadd.f32 %v1266, 1.0
        %v1331 = vadd.f32 %v1267, 1.0
        %v1332 = vadd.f32 %v1268, 1.0
        %v1333 = vadd.f32 %v1269, 1.0
        %v1334 = vadd.f32 %v1270, 1.0
        %v1335 = vadd.f32 %v1271, 1.0
        %v1336 = vadd.f32 %v1272, 1.0
        %v1337 = vadd.f32 %v1273, 1.0
        %v1338 = vadd.f32 %v1274, 1.0
        %v1339 = vadd.f32 %v1275, 1.0
        %v1340 = vadd.f32 %v1276, 1.0
        %v1341 = vadd.f32 %v1277, 1.0
        %v1342 = vadd.f32 %v1278, 1.0
        %v1343 = vadd.f32 %v1279, 1.0
        %v1344 = vadd.f32 %v1280, 1.0
        %v1345 = vadd.f32 %v1281, 1.0
        %v1346 = vadd.f32 %v1282, 1.0
        %v1347 = vadd.f32 %v1283, 1.0
        %v1348 = vadd.f32 %v1284, 1.0
        %v1349 = vadd.f32 %v1285, 1.0
        %v1350 = vadd.f32 %v1286, 1.0
        %v1351 = vadd.f32 %v1287, 1.0
        %v1352 = vadd.f32 %v1288, 1.0
        %v1353 = vadd.f32 %v1289, 1.0
        %v1354 = vadd.f32 %v1290, 1.0
        %v1355 = vadd.f32 %v1291, 1.0
        %v1356 = vadd.f32 %v1292, 1.0
        %v1357 = vadd.f32 %v1293, 1.0
        %v1358 = vadd.f32 %v1294, 1.0
        %v1359 = vadd.f32 %v1295, 1.0
        %v1360 = vadd.f32 %v1296, 1.0
        %v1361 = vadd.f32 %v1297, 1.0
        %v1362 = vadd.f32 %v1298, 1.0
        %v1363 = vadd.f32 %v1299, 1.0
        %v1364 = vadd.f32 %v1300, 1.0
        %v1365 = vadd.f32 %v1301, 1.0
        %v1366 = vadd.f32 %v1302, 1.0
        %v1367 = vadd.f32 %v1303, 1.0
        %v1368 = vadd.f32 %v1304, 1.0
        %v1369 = vadd.f32 %v1305, 1.0
        %v1370 = vadd.f32 %v1306, 1.0
        %v1371 = vadd.f32 %v1307, 1.0
        %v1372 = vadd.f32 %v1308, 1.0
        %v1373 = vadd.f32 %v1309, 1.0
        %v1374 = vadd.f32 %v1310, 1.0
        %v1375 = vadd.f32 %v1311, 1.0
        %v1376 = vadd.f32 %v1312, 1.0
        %v1377 = vadd.f32 %v1313, 1.0
        %v1378 = vadd.f32 %v1314, 1.0
        %v1379 = vadd.f32 %v1315, 1.0
        %v1380 = vmul.f32 %v1124, %v1316
        %v1381 = vmul.f32 %v1125, %v1317
        %v1382 = vmul.f32 %v1126, %v1318
        %v1383 = vmul.f32 %v1127, %v1319
        %v1384 = vmul.f32 %v1128, %v1320
        %v1385 = vmul.f32 %v1129, %v1321
        %v1386 = vmul.f32 %v1130, %v1322
        %v1387 = vmul.f32 %v1131, %v1323
        %v1388 = vmul.f32 %v1132, %v1324
        %v1389 = vmul.f32 %v1133, %v1325
        %v1390 = vmul.f32 %v1134, %v1326
        %v1391 = vmul.f32 %v1135, %v1327
        %v1392 = vmul.f32 %v1136, %v1328
        %v1393 = vmul.f32 %v1137, %v1329
        %v1394 = vmul.f32 %v1138, %v1330
        %v1395 = vmul.f32 %v1139, %v1331
        %v1396 = vmul.f32 %v1140, %v1332
        %v1397 = vmul.f32 %v1141, %v1333
        %v1398 = vmul.f32 %v1142, %v1334
        %v1399 = vmul.f32 %v1143, %v1335
        %v1400 = vmul.f32 %v1144, %v1336
        %v1401 = vmul.f32 %v1145, %v1337
        %v1402 = vmul.f32 %v1146, %v1338
        %v1403 = vmul.f32 %v1147, %v1339
        %v1404 = vmul.f32 %v1148, %v1340
        %v1405 = vmul.f32 %v1149, %v1341
        %v1406 = vmul.f32 %v1150, %v1342
        %v1407 = vmul.f32 %v1151, %v1343
        %v1408 = vmul.f32 %v1152, %v1344
        %v1409 = vmul.f32 %v1153, %v1345
        %v1410 = vmul.f32 %v1154, %v1346
        %v1411 = vmul.f32 %v1155, %v1347
        %v1412 = vmul.f32 %v1156, %v1348
        %v1413 = vmul.f32 %v1157, %v1349
        %v1414 = vmul.f32 %v1158, %v1350
        %v1415 = vmul.f32 %v1159, %v1351
        %v1416 = vmul.f32 %v1160, %v1352
        %v1417 = vmul.f32 %v1161, %v1353
        %v1418 = vmul.f32 %v1162, %v1354
        %v1419 = vmul.f32 %v1163, %v1355
        %v1420 = vmul.f32 %v1164, %v1356
        %v1421 = vmul.f32 %v1165, %v1357
        %v1422 = vmul.f32 %v1166, %v1358
        %v1423 = vmul.f32 %v1167, %v1359
        %v1424 = vmul.f32 %v1168, %v1360
        %v1425 = vmul.f32 %v1169, %v1361
        %v1426 = vmul.f32 %v1170, %v1362
        %v1427 = vmul.f32 %v1171, %v1363
        %v1428 = vmul.f32 %v1172, %v1364
        %v1429 = vmul.f32 %v1173, %v1365
        %v1430 = vmul.f32 %v1174, %v1366
        %v1431 = vmul.f32 %v1175, %v1367
        %v1432 = vmul.f32 %v1176, %v1368
        %v1433 = vmul.f32 %v1177, %v1369
        %v1434 = vmul.f32 %v1178, %v1370
        %v1435 = vmul.f32 %v1179, %v1371
        %v1436 = vmul.f32 %v1180, %v1372
        %v1437 = vmul.f32 %v1181, %v1373
        %v1438 = vmul.f32 %v1182, %v1374
        %v1439 = vmul.f32 %v1183, %v1375
        %v1440 = vmul.f32 %v1184, %v1376
        %v1441 = vmul.f32 %v1185, %v1377
        %v1442 = vmul.f32 %v1186, %v1378
        %v1443 = vmul.f32 %v1187, %v1379
        %v1444 = vpack.c.bf16 %v1384, %v1380
        %v1445 = vpack.c.bf16 %v1385, %v1381
        %v1446 = vpack.c.bf16 %v1386, %v1382
        %v1447 = vpack.c.bf16 %v1387, %v1383
        %v1448 = vpack.c.bf16 %v1392, %v1388
        %v1449 = vpack.c.bf16 %v1393, %v1389
        %v1450 = vpack.c.bf16 %v1394, %v1390
        %v1451 = vpack.c.bf16 %v1395, %v1391
        %v1452 = vpack.c.bf16 %v1400, %v1396
        %v1453 = vpack.c.bf16 %v1401, %v1397
        %v1454 = vpack.c.bf16 %v1402, %v1398
        %v1455 = vpack.c.bf16 %v1403, %v1399
        %v1456 = vpack.c.bf16 %v1408, %v1404
        %v1457 = vpack.c.bf16 %v1409, %v1405
        %v1458 = vpack.c.bf16 %v1410, %v1406
        %v1459 = vpack.c.bf16 %v1411, %v1407
        %v1460 = vpack.c.bf16 %v1416, %v1412
        %v1461 = vpack.c.bf16 %v1417, %v1413
        %v1462 = vpack.c.bf16 %v1418, %v1414
        %v1463 = vpack.c.bf16 %v1419, %v1415
        %v1464 = vpack.c.bf16 %v1424, %v1420
        %v1465 = vpack.c.bf16 %v1425, %v1421
        %v1466 = vpack.c.bf16 %v1426, %v1422
        %v1467 = vpack.c.bf16 %v1427, %v1423
        %v1468 = vpack.c.bf16 %v1432, %v1428
        %v1469 = vpack.c.bf16 %v1433, %v1429
        %v1470 = vpack.c.bf16 %v1434, %v1430
        %v1471 = vpack.c.bf16 %v1435, %v1431
        %v1472 = vpack.c.bf16 %v1440, %v1436
        %v1473 = vpack.c.bf16 %v1441, %v1437
        %v1474 = vpack.c.bf16 %v1442, %v1438
        %v1475 = vpack.c.bf16 %v1443, %v1439
        %v1476 = vld [vmem:[#allocation5] sm:$0xff]
        %v1477 = vld [vmem:[#allocation5 + $0x8] sm:$0xff]
        %v1478 = vld [vmem:[#allocation5 + $0x10] sm:$0xff]
        %v1479 = vld [vmem:[#allocation5 + $0x18] sm:$0xff]
        %v1480 = vld [vmem:[#allocation5 + $0x20] sm:$0xff]
        %v1481 = vld [vmem:[#allocation5 + $0x28] sm:$0xff]
        %v1482 = vld [vmem:[#allocation5 + $0x30] sm:$0xff]
        %v1483 = vld [vmem:[#allocation5 + $0x38] sm:$0xff]
        %v1484 = vld [vmem:[%s6] sm:$0xff]
        %v1485 = vld [vmem:[%s6 + $0x8] sm:$0xff]
        %v1486 = vld [vmem:[%s6 + $0x10] sm:$0xff]
        %v1487 = vld [vmem:[%s6 + $0x18] sm:$0xff]
        %v1488 = vld [vmem:[%s6 + $0x20] sm:$0xff]
        %v1489 = vld [vmem:[%s6 + $0x28] sm:$0xff]
        %v1490 = vld [vmem:[%s6 + $0x30] sm:$0xff]
        %v1491 = vld [vmem:[%s6 + $0x38] sm:$0xff]
        %1493 = vset.pattern.permute.xlu0 0
        %1494 = vperm.xlu0 %1493, %v1484
        %v1495 = vpop.permute.xlu0 %1494
        %1498 = vset.pattern.permute.xlu0 0
        %1499 = vperm.xlu0 %1498, %v1485
        %v1500 = vpop.permute.xlu0 %1499
        %1503 = vset.pattern.permute.xlu0 0
        %1504 = vperm.xlu0 %1503, %v1486
        %v1505 = vpop.permute.xlu0 %1504
        %1508 = vset.pattern.permute.xlu0 0
        %1509 = vperm.xlu0 %1508, %v1487
        %v1510 = vpop.permute.xlu0 %1509
        %1513 = vset.pattern.permute.xlu0 0
        %1514 = vperm.xlu0 %1513, %v1488
        %v1515 = vpop.permute.xlu0 %1514
        %1518 = vset.pattern.permute.xlu0 0
        %1519 = vperm.xlu0 %1518, %v1489
        %v1520 = vpop.permute.xlu0 %1519
        %1523 = vset.pattern.permute.xlu0 0
        %1524 = vperm.xlu0 %1523, %v1490
        %v1525 = vpop.permute.xlu0 %1524
        %1528 = vset.pattern.permute.xlu0 0
        %1529 = vperm.xlu0 %1528, %v1491
        %v1530 = vpop.permute.xlu0 %1529
        %v1540 = vunpack.c.l.b16 %v1476
        %v1541 = vunpack.c.h.b16 %v1476
        %v1542 = vunpack.c.l.b16 %v1477
        %v1543 = vunpack.c.h.b16 %v1477
        %v1544 = vunpack.c.l.b16 %v1478
        %v1545 = vunpack.c.h.b16 %v1478
        %v1546 = vunpack.c.l.b16 %v1479
        %v1547 = vunpack.c.h.b16 %v1479
        %v1548 = vunpack.c.l.b16 %v1480
        %v1549 = vunpack.c.h.b16 %v1480
        %v1550 = vunpack.c.l.b16 %v1481
        %v1551 = vunpack.c.h.b16 %v1481
        %v1552 = vunpack.c.l.b16 %v1482
        %v1553 = vunpack.c.h.b16 %v1482
        %v1554 = vunpack.c.l.b16 %v1483
        %v1555 = vunpack.c.h.b16 %v1483
        %v1556 = vpack.c.b16 %v1542, %v1540
        %v1557 = vpack.c.b16 %v1543, %v1541
        %v1558 = vpack.c.b16 %v1546, %v1544
        %v1559 = vpack.c.b16 %v1547, %v1545
        %v1560 = vpack.c.b16 %v1550, %v1548
        %v1561 = vpack.c.b16 %v1551, %v1549
        %v1562 = vpack.c.b16 %v1554, %v1552
        %v1563 = vpack.c.b16 %v1555, %v1553
        %1572 = vmatprep.subr.bf16.mxu0 %v1445
        %1573 = vmatpush1.bf16.xpose.msra.mxu0 %v1444
        %1574 = vmatprep.subr.bf16.mxu0 %v1449
        %1575 = vmatpush1.bf16.xpose.msra.mxu0 %v1448
        %1576 = vmatprep.subr.bf16.mxu0 %v1453
        %1577 = vmatpush1.bf16.xpose.msra.mxu0 %v1452
        %1578 = vmatprep.subr.bf16.mxu0 %v1457
        %1579 = vmatpush1.bf16.xpose.msra.mxu0 %v1456
        %1580 = vmatprep.subr.bf16.mxu0 %v1461
        %1581 = vmatpush1.bf16.xpose.msra.mxu0 %v1460
        %1582 = vmatprep.subr.bf16.mxu0 %v1465
        %1583 = vmatpush1.bf16.xpose.msra.mxu0 %v1464
        %1584 = vmatprep.subr.bf16.mxu0 %v1469
        %1585 = vmatpush1.bf16.xpose.msra.mxu0 %v1468
        %1586 = vmatprep.subr.bf16.mxu0 %v1473
        %1587 = vmatpush1.bf16.xpose.msra.mxu0 %v1472
        %1588 = vmatprep.subr.bf16.mxu0 0
        %1589 = vmatpush1.bf16.xpose.msra.mxu0 0
        %1590 = vmatprep.subr.bf16.mxu0 0
        %1591 = vmatpush1.bf16.xpose.msra.mxu0 0
        %1592 = vmatprep.subr.bf16.mxu0 0
        %1593 = vmatpush1.bf16.xpose.msra.mxu0 0
        %1594 = vmatprep.subr.bf16.mxu0 0
        %1595 = vmatpush1.bf16.xpose.msra.mxu0 0
        %1596 = vmatprep.subr.bf16.mxu0 0
        %1597 = vmatpush1.bf16.xpose.msra.mxu0 0
        %1598 = vmatprep.subr.bf16.mxu0 0
        %1599 = vmatpush1.bf16.xpose.msra.mxu0 0
        %1600 = vmatprep.subr.bf16.mxu0 0
        %1601 = vmatpush1.bf16.xpose.msra.mxu0 0
        %1602 = vmatprep.subr.bf16.mxu0 0
        %1603 = vmatpush1.bf16.xpose.msra.mxu0 0
        %1604 = vmatprep.mubr.bf16.mxu0 %v1557
        %1605 = vmatmul.mubr.bf16.gmra.mrb[0].mxu0 %v1556
        %v1606 = vpop.f32.mrb[0].mxu0
        %v1607 = vadd.f32 %v1495, %v1606
        %v1608 = vpop.f32.mrb[0].mxu0
        %v1609 = vpop.f32.mrb[0].mxu0
        %v1610 = vadd.f32 %v1500, %v1609
        %v1611 = vpop.f32.mrb[0].mxu0
        %1612 = vmatprep.mubr.bf16.mxu0 %v1559
        %1613 = vmatmul.mubr.bf16.gmra.mrb[0].mxu0 %v1558
        %v1614 = vpop.f32.mrb[0].mxu0
        %v1615 = vadd.f32 %v1505, %v1614
        %v1616 = vpop.f32.mrb[0].mxu0
        %v1617 = vpop.f32.mrb[0].mxu0
        %v1618 = vadd.f32 %v1510, %v1617
        %v1619 = vpop.f32.mrb[0].mxu0
        %1620 = vmatprep.mubr.bf16.mxu0 %v1561
        %1621 = vmatmul.mubr.bf16.gmra.mrb[0].mxu0 %v1560
        %v1622 = vpop.f32.mrb[0].mxu0
        %v1623 = vadd.f32 %v1515, %v1622
        %v1624 = vpop.f32.mrb[0].mxu0
        %v1625 = vpop.f32.mrb[0].mxu0
        %v1626 = vadd.f32 %v1520, %v1625
        %v1627 = vpop.f32.mrb[0].mxu0
        %1628 = vmatprep.mubr.bf16.mxu0 %v1563
        %1629 = vmatmul.mubr.bf16.gmra.mrb[0].mxu0 %v1562
        %v1630 = vpop.f32.mrb[0].mxu0
        %v1631 = vadd.f32 %v1525, %v1630
        %v1632 = vpop.f32.mrb[0].mxu0
        %v1633 = vpop.f32.mrb[0].mxu0
        %v1634 = vadd.f32 %v1530, %v1633
        %v1635 = vpop.f32.mrb[0].mxu0
        %1636 = vdwg.mxu0
        %v1637 = vld [vmem:[#allocation7] sm:$0xff]
        %v1638 = vld [vmem:[#allocation7 + $0x8] sm:$0xff]
        %v1639 = vld [vmem:[#allocation7 + $0x10] sm:$0xff]
        %v1640 = vld [vmem:[#allocation7 + $0x18] sm:$0xff]
        %v1641 = vld [vmem:[#allocation7 + $0x20] sm:$0xff]
        %v1642 = vld [vmem:[#allocation7 + $0x28] sm:$0xff]
        %v1643 = vld [vmem:[#allocation7 + $0x30] sm:$0xff]
        %v1644 = vld [vmem:[#allocation7 + $0x38] sm:$0xff]
        %v1645 = vld [vmem:[%s8] sm:$0xff]
        %v1646 = vld [vmem:[%s8 + $0x8] sm:$0xff]
        %v1647 = vld [vmem:[%s8 + $0x10] sm:$0xff]
        %v1648 = vld [vmem:[%s8 + $0x18] sm:$0xff]
        %v1649 = vld [vmem:[%s8 + $0x20] sm:$0xff]
        %v1650 = vld [vmem:[%s8 + $0x28] sm:$0xff]
        %v1651 = vld [vmem:[%s8 + $0x30] sm:$0xff]
        %v1652 = vld [vmem:[%s8 + $0x38] sm:$0xff]
        %1654 = vset.pattern.permute.xlu0 0
        %1655 = vperm.xlu0 %1654, %v1645
        %v1656 = vpop.permute.xlu0 %1655
        %1659 = vset.pattern.permute.xlu0 0
        %1660 = vperm.xlu0 %1659, %v1646
        %v1661 = vpop.permute.xlu0 %1660
        %1664 = vset.pattern.permute.xlu0 0
        %1665 = vperm.xlu0 %1664, %v1647
        %v1666 = vpop.permute.xlu0 %1665
        %1669 = vset.pattern.permute.xlu0 0
        %1670 = vperm.xlu0 %1669, %v1648
        %v1671 = vpop.permute.xlu0 %1670
        %1674 = vset.pattern.permute.xlu0 0
        %1675 = vperm.xlu0 %1674, %v1649
        %v1676 = vpop.permute.xlu0 %1675
        %1679 = vset.pattern.permute.xlu0 0
        %1680 = vperm.xlu0 %1679, %v1650
        %v1681 = vpop.permute.xlu0 %1680
        %1684 = vset.pattern.permute.xlu0 0
        %1685 = vperm.xlu0 %1684, %v1651
        %v1686 = vpop.permute.xlu0 %1685
        %1689 = vset.pattern.permute.xlu0 0
        %1690 = vperm.xlu0 %1689, %v1652
        %v1691 = vpop.permute.xlu0 %1690
        %v1701 = vunpack.c.l.b16 %v1637
        %v1702 = vunpack.c.h.b16 %v1637
        %v1703 = vunpack.c.l.b16 %v1638
        %v1704 = vunpack.c.h.b16 %v1638
        %v1705 = vunpack.c.l.b16 %v1639
        %v1706 = vunpack.c.h.b16 %v1639
        %v1707 = vunpack.c.l.b16 %v1640
        %v1708 = vunpack.c.h.b16 %v1640
        %v1709 = vunpack.c.l.b16 %v1641
        %v1710 = vunpack.c.h.b16 %v1641
        %v1711 = vunpack.c.l.b16 %v1642
        %v1712 = vunpack.c.h.b16 %v1642
        %v1713 = vunpack.c.l.b16 %v1643
        %v1714 = vunpack.c.h.b16 %v1643
        %v1715 = vunpack.c.l.b16 %v1644
        %v1716 = vunpack.c.h.b16 %v1644
        %v1717 = vpack.c.b16 %v1703, %v1701
        %v1718 = vpack.c.b16 %v1704, %v1702
        %v1719 = vpack.c.b16 %v1707, %v1705
        %v1720 = vpack.c.b16 %v1708, %v1706
        %v1721 = vpack.c.b16 %v1711, %v1709
        %v1722 = vpack.c.b16 %v1712, %v1710
        %v1723 = vpack.c.b16 %v1715, %v1713
        %v1724 = vpack.c.b16 %v1716, %v1714
        %1733 = vmatprep.subr.bf16.mxu0 %v1447
        %1734 = vmatpush1.bf16.xpose.msra.mxu0 %v1446
        %1735 = vmatprep.subr.bf16.mxu0 %v1451
        %1736 = vmatpush1.bf16.xpose.msra.mxu0 %v1450
        %1737 = vmatprep.subr.bf16.mxu0 %v1455
        %1738 = vmatpush1.bf16.xpose.msra.mxu0 %v1454
        %1739 = vmatprep.subr.bf16.mxu0 %v1459
        %1740 = vmatpush1.bf16.xpose.msra.mxu0 %v1458
        %1741 = vmatprep.subr.bf16.mxu0 %v1463
        %1742 = vmatpush1.bf16.xpose.msra.mxu0 %v1462
        %1743 = vmatprep.subr.bf16.mxu0 %v1467
        %1744 = vmatpush1.bf16.xpose.msra.mxu0 %v1466
        %1745 = vmatprep.subr.bf16.mxu0 %v1471
        %1746 = vmatpush1.bf16.xpose.msra.mxu0 %v1470
        %1747 = vmatprep.subr.bf16.mxu0 %v1475
        %1748 = vmatpush1.bf16.xpose.msra.mxu0 %v1474
        %1749 = vmatprep.subr.bf16.mxu0 0
        %1750 = vmatpush1.bf16.xpose.msra.mxu0 0
        %1751 = vmatprep.subr.bf16.mxu0 0
        %1752 = vmatpush1.bf16.xpose.msra.mxu0 0
        %1753 = vmatprep.subr.bf16.mxu0 0
        %1754 = vmatpush1.bf16.xpose.msra.mxu0 0
        %1755 = vmatprep.subr.bf16.mxu0 0
        %1756 = vmatpush1.bf16.xpose.msra.mxu0 0
        %1757 = vmatprep.subr.bf16.mxu0 0
        %1758 = vmatpush1.bf16.xpose.msra.mxu0 0
        %1759 = vmatprep.subr.bf16.mxu0 0
        %1760 = vmatpush1.bf16.xpose.msra.mxu0 0
        %1761 = vmatprep.subr.bf16.mxu0 0
        %1762 = vmatpush1.bf16.xpose.msra.mxu0 0
        %1763 = vmatprep.subr.bf16.mxu0 0
        %1764 = vmatpush1.bf16.xpose.msra.mxu0 0
        %1765 = vmatprep.mubr.bf16.mxu0 %v1718
        %1766 = vmatmul.mubr.bf16.gmra.mrb[0].mxu0 %v1717
        %v1767 = vpop.f32.mrb[0].mxu0
        %v1768 = vadd.f32 %v1656, %v1767
        %v1769 = vpop.f32.mrb[0].mxu0
        %v1770 = vpop.f32.mrb[0].mxu0
        %v1771 = vadd.f32 %v1661, %v1770
        %v1772 = vpop.f32.mrb[0].mxu0
        %1773 = vmatprep.mubr.bf16.mxu0 %v1720
        %1774 = vmatmul.mubr.bf16.gmra.mrb[0].mxu0 %v1719
        %v1775 = vpop.f32.mrb[0].mxu0
        %v1776 = vadd.f32 %v1666, %v1775
        %v1777 = vpop.f32.mrb[0].mxu0
        %v1778 = vpop.f32.mrb[0].mxu0
        %v1779 = vadd.f32 %v1671, %v1778
        %v1780 = vpop.f32.mrb[0].mxu0
        %1781 = vmatprep.mubr.bf16.mxu0 %v1722
        %1782 = vmatmul.mubr.bf16.gmra.mrb[0].mxu0 %v1721
        %v1783 = vpop.f32.mrb[0].mxu0
        %v1784 = vadd.f32 %v1676, %v1783
        %v1785 = vpop.f32.mrb[0].mxu0
        %v1786 = vpop.f32.mrb[0].mxu0
        %v1787 = vadd.f32 %v1681, %v1786
        %v1788 = vpop.f32.mrb[0].mxu0
        %1789 = vmatprep.mubr.bf16.mxu0 %v1724
        %1790 = vmatmul.mubr.bf16.gmra.mrb[0].mxu0 %v1723
        %v1791 = vpop.f32.mrb[0].mxu0
        %v1792 = vadd.f32 %v1686, %v1791
        %v1793 = vpop.f32.mrb[0].mxu0
        %v1794 = vpop.f32.mrb[0].mxu0
        %v1795 = vadd.f32 %v1691, %v1794
        %v1796 = vpop.f32.mrb[0].mxu0
        %1797 = vdwg.mxu0
        %v1798 = vpack.c.bf16 %v1610, %v1607
        %v1799 = vpack.c.bf16 %v1618, %v1615
        %v1800 = vpack.c.bf16 %v1626, %v1623
        %v1801 = vpack.c.bf16 %v1634, %v1631
        %v1806 = vunpack.c.l.b16 %v1798
        %v1807 = vunpack.c.h.b16 %v1798
        %v1808 = vunpack.c.l.b16 %v1799
        %v1809 = vunpack.c.h.b16 %v1799
        %v1810 = vunpack.c.l.b16 %v1800
        %v1811 = vunpack.c.h.b16 %v1800
        %v1812 = vunpack.c.l.b16 %v1801
        %v1813 = vunpack.c.h.b16 %v1801
        %v1814 = vpack.c.b16 %v1806, %v1806
        %v1815 = vpack.c.b16 %v1807, %v1807
        %v1816 = vpack.c.b16 %v1808, %v1808
        %v1817 = vpack.c.b16 %v1809, %v1809
        %v1818 = vpack.c.b16 %v1810, %v1810
        %v1819 = vpack.c.b16 %v1811, %v1811
        %v1820 = vpack.c.b16 %v1812, %v1812
        %v1821 = vpack.c.b16 %v1813, %v1813
        %1830 = vst [vmem:[%s410] sm:$0xf] %v1814
        %1831 = vst [vmem:[%s410 + $0x4] sm:$0xf] %v1815
        %1832 = vst [vmem:[%s410 + $0x8] sm:$0xf] %v1816
        %1833 = vst [vmem:[%s410 + $0xc] sm:$0xf] %v1817
        %1834 = vst [vmem:[%s410 + $0x10] sm:$0xf] %v1818
        %1835 = vst [vmem:[%s410 + $0x14] sm:$0xf] %v1819
        %1836 = vst [vmem:[%s410 + $0x18] sm:$0xf] %v1820
        %1837 = vst [vmem:[%s410 + $0x1c] sm:$0xf] %v1821
        %v1838 = vpack.c.bf16 %v1771, %v1768
        %v1839 = vpack.c.bf16 %v1779, %v1776
        %v1840 = vpack.c.bf16 %v1787, %v1784
        %v1841 = vpack.c.bf16 %v1795, %v1792
        %v1846 = vunpack.c.l.b16 %v1838
        %v1847 = vunpack.c.h.b16 %v1838
        %v1848 = vunpack.c.l.b16 %v1839
        %v1849 = vunpack.c.h.b16 %v1839
        %v1850 = vunpack.c.l.b16 %v1840
        %v1851 = vunpack.c.h.b16 %v1840
        %v1852 = vunpack.c.l.b16 %v1841
        %v1853 = vunpack.c.h.b16 %v1841
        %v1854 = vpack.c.b16 %v1846, %v1846
        %v1855 = vpack.c.b16 %v1847, %v1847
        %v1856 = vpack.c.b16 %v1848, %v1848
        %v1857 = vpack.c.b16 %v1849, %v1849
        %v1858 = vpack.c.b16 %v1850, %v1850
        %v1859 = vpack.c.b16 %v1851, %v1851
        %v1860 = vpack.c.b16 %v1852, %v1852
        %v1861 = vpack.c.b16 %v1853, %v1853
        %1870 = vst [vmem:[%s417] sm:$0xf] %v1854
        %1871 = vst [vmem:[%s417 + $0x4] sm:$0xf] %v1855
        %1872 = vst [vmem:[%s417 + $0x8] sm:$0xf] %v1856
        %1873 = vst [vmem:[%s417 + $0xc] sm:$0xf] %v1857
        %1874 = vst [vmem:[%s417 + $0x10] sm:$0xf] %v1858
        %1875 = vst [vmem:[%s417 + $0x14] sm:$0xf] %v1859
        %1876 = vst [vmem:[%s417 + $0x18] sm:$0xf] %v1860
        %1877 = vst [vmem:[%s417 + $0x1c] sm:$0xf] %v1861
        %s1878 = scalar_lea.vmem [#allocation5], 64
        %v1879 = vld [vmem:[%s1878] sm:$0xff]
        %v1880 = vld [vmem:[%s1878 + $0x8] sm:$0xff]
        %v1881 = vld [vmem:[%s1878 + $0x10] sm:$0xff]
        %v1882 = vld [vmem:[%s1878 + $0x18] sm:$0xff]
        %v1883 = vld [vmem:[%s1878 + $0x20] sm:$0xff]
        %v1884 = vld [vmem:[%s1878 + $0x28] sm:$0xff]
        %v1885 = vld [vmem:[%s1878 + $0x30] sm:$0xff]
        %v1886 = vld [vmem:[%s1878 + $0x38] sm:$0xff]
        %s1887 = scalar_lea.vmem %s6, 64
        %v1888 = vld [vmem:[%s1887] sm:$0xff]
        %v1889 = vld [vmem:[%s1887 + $0x8] sm:$0xff]
        %v1890 = vld [vmem:[%s1887 + $0x10] sm:$0xff]
        %v1891 = vld [vmem:[%s1887 + $0x18] sm:$0xff]
        %v1892 = vld [vmem:[%s1887 + $0x20] sm:$0xff]
        %v1893 = vld [vmem:[%s1887 + $0x28] sm:$0xff]
        %v1894 = vld [vmem:[%s1887 + $0x30] sm:$0xff]
        %v1895 = vld [vmem:[%s1887 + $0x38] sm:$0xff]
        %1897 = vset.pattern.permute.xlu0 0
        %1898 = vperm.xlu0 %1897, %v1888
        %v1899 = vpop.permute.xlu0 %1898
        %1902 = vset.pattern.permute.xlu0 0
        %1903 = vperm.xlu0 %1902, %v1889
        %v1904 = vpop.permute.xlu0 %1903
        %1907 = vset.pattern.permute.xlu0 0
        %1908 = vperm.xlu0 %1907, %v1890
        %v1909 = vpop.permute.xlu0 %1908
        %1912 = vset.pattern.permute.xlu0 0
        %1913 = vperm.xlu0 %1912, %v1891
        %v1914 = vpop.permute.xlu0 %1913
        %1917 = vset.pattern.permute.xlu0 0
        %1918 = vperm.xlu0 %1917, %v1892
        %v1919 = vpop.permute.xlu0 %1918
        %1922 = vset.pattern.permute.xlu0 0
        %1923 = vperm.xlu0 %1922, %v1893
        %v1924 = vpop.permute.xlu0 %1923
        %1927 = vset.pattern.permute.xlu0 0
        %1928 = vperm.xlu0 %1927, %v1894
        %v1929 = vpop.permute.xlu0 %1928
        %1932 = vset.pattern.permute.xlu0 0
        %1933 = vperm.xlu0 %1932, %v1895
        %v1934 = vpop.permute.xlu0 %1933
        %v1944 = vunpack.c.l.b16 %v1879
        %v1945 = vunpack.c.h.b16 %v1879
        %v1946 = vunpack.c.l.b16 %v1880
        %v1947 = vunpack.c.h.b16 %v1880
        %v1948 = vunpack.c.l.b16 %v1881
        %v1949 = vunpack.c.h.b16 %v1881
        %v1950 = vunpack.c.l.b16 %v1882
        %v1951 = vunpack.c.h.b16 %v1882
        %v1952 = vunpack.c.l.b16 %v1883
        %v1953 = vunpack.c.h.b16 %v1883
        %v1954 = vunpack.c.l.b16 %v1884
        %v1955 = vunpack.c.h.b16 %v1884
        %v1956 = vunpack.c.l.b16 %v1885
        %v1957 = vunpack.c.h.b16 %v1885
        %v1958 = vunpack.c.l.b16 %v1886
        %v1959 = vunpack.c.h.b16 %v1886
        %v1960 = vpack.c.b16 %v1946, %v1944
        %v1961 = vpack.c.b16 %v1947, %v1945
        %v1962 = vpack.c.b16 %v1950, %v1948
        %v1963 = vpack.c.b16 %v1951, %v1949
        %v1964 = vpack.c.b16 %v1954, %v1952
        %v1965 = vpack.c.b16 %v1955, %v1953
        %v1966 = vpack.c.b16 %v1958, %v1956
        %v1967 = vpack.c.b16 %v1959, %v1957
        %1976 = vmatprep.subr.bf16.mxu0 %v1445
        %1977 = vmatpush1.bf16.xpose.msra.mxu0 %v1444
        %1978 = vmatprep.subr.bf16.mxu0 %v1449
        %1979 = vmatpush1.bf16.xpose.msra.mxu0 %v1448
        %1980 = vmatprep.subr.bf16.mxu0 %v1453
        %1981 = vmatpush1.bf16.xpose.msra.mxu0 %v1452
        %1982 = vmatprep.subr.bf16.mxu0 %v1457
        %1983 = vmatpush1.bf16.xpose.msra.mxu0 %v1456
        %1984 = vmatprep.subr.bf16.mxu0 %v1461
        %1985 = vmatpush1.bf16.xpose.msra.mxu0 %v1460
        %1986 = vmatprep.subr.bf16.mxu0 %v1465
        %1987 = vmatpush1.bf16.xpose.msra.mxu0 %v1464
        %1988 = vmatprep.subr.bf16.mxu0 %v1469
        %1989 = vmatpush1.bf16.xpose.msra.mxu0 %v1468
        %1990 = vmatprep.subr.bf16.mxu0 %v1473
        %1991 = vmatpush1.bf16.xpose.msra.mxu0 %v1472
        %1992 = vmatprep.subr.bf16.mxu0 0
        %1993 = vmatpush1.bf16.xpose.msra.mxu0 0
        %1994 = vmatprep.subr.bf16.mxu0 0
        %1995 = vmatpush1.bf16.xpose.msra.mxu0 0
        %1996 = vmatprep.subr.bf16.mxu0 0
        %1997 = vmatpush1.bf16.xpose.msra.mxu0 0
        %1998 = vmatprep.subr.bf16.mxu0 0
        %1999 = vmatpush1.bf16.xpose.msra.mxu0 0
        %2000 = vmatprep.subr.bf16.mxu0 0
        %2001 = vmatpush1.bf16.xpose.msra.mxu0 0
        %2002 = vmatprep.subr.bf16.mxu0 0
        %2003 = vmatpush1.bf16.xpose.msra.mxu0 0
        %2004 = vmatprep.subr.bf16.mxu0 0
        %2005 = vmatpush1.bf16.xpose.msra.mxu0 0
        %2006 = vmatprep.subr.bf16.mxu0 0
        %2007 = vmatpush1.bf16.xpose.msra.mxu0 0
        %2008 = vmatprep.mubr.bf16.mxu0 %v1961
        %2009 = vmatmul.mubr.bf16.gmra.mrb[0].mxu0 %v1960
        %v2010 = vpop.f32.mrb[0].mxu0
        %v2011 = vadd.f32 %v1899, %v2010
        %v2012 = vpop.f32.mrb[0].mxu0
        %v2013 = vpop.f32.mrb[0].mxu0
        %v2014 = vadd.f32 %v1904, %v2013
        %v2015 = vpop.f32.mrb[0].mxu0
        %2016 = vmatprep.mubr.bf16.mxu0 %v1963
        %2017 = vmatmul.mubr.bf16.gmra.mrb[0].mxu0 %v1962
        %v2018 = vpop.f32.mrb[0].mxu0
        %v2019 = vadd.f32 %v1909, %v2018
        %v2020 = vpop.f32.mrb[0].mxu0
        %v2021 = vpop.f32.mrb[0].mxu0
        %v2022 = vadd.f32 %v1914, %v2021
        %v2023 = vpop.f32.mrb[0].mxu0
        %2024 = vmatprep.mubr.bf16.mxu0 %v1965
        %2025 = vmatmul.mubr.bf16.gmra.mrb[0].mxu0 %v1964
        %v2026 = vpop.f32.mrb[0].mxu0
        %v2027 = vadd.f32 %v1919, %v2026
        %v2028 = vpop.f32.mrb[0].mxu0
        %v2029 = vpop.f32.mrb[0].mxu0
        %v2030 = vadd.f32 %v1924, %v2029
        %v2031 = vpop.f32.mrb[0].mxu0
        %2032 = vmatprep.mubr.bf16.mxu0 %v1967
        %2033 = vmatmul.mubr.bf16.gmra.mrb[0].mxu0 %v1966
        %v2034 = vpop.f32.mrb[0].mxu0
        %v2035 = vadd.f32 %v1929, %v2034
        %v2036 = vpop.f32.mrb[0].mxu0
        %v2037 = vpop.f32.mrb[0].mxu0
        %v2038 = vadd.f32 %v1934, %v2037
        %v2039 = vpop.f32.mrb[0].mxu0
        %2040 = vdwg.mxu0
        %s2041 = scalar_lea.vmem [#allocation7], 64
        %v2042 = vld [vmem:[%s2041] sm:$0xff]
        %v2043 = vld [vmem:[%s2041 + $0x8] sm:$0xff]
        %v2044 = vld [vmem:[%s2041 + $0x10] sm:$0xff]
        %v2045 = vld [vmem:[%s2041 + $0x18] sm:$0xff]
        %v2046 = vld [vmem:[%s2041 + $0x20] sm:$0xff]
        %v2047 = vld [vmem:[%s2041 + $0x28] sm:$0xff]
        %v2048 = vld [vmem:[%s2041 + $0x30] sm:$0xff]
        %v2049 = vld [vmem:[%s2041 + $0x38] sm:$0xff]
        %s2050 = scalar_lea.vmem %s8, 64
        %v2051 = vld [vmem:[%s2050] sm:$0xff]
        %v2052 = vld [vmem:[%s2050 + $0x8] sm:$0xff]
        %v2053 = vld [vmem:[%s2050 + $0x10] sm:$0xff]
        %v2054 = vld [vmem:[%s2050 + $0x18] sm:$0xff]
        %v2055 = vld [vmem:[%s2050 + $0x20] sm:$0xff]
        %v2056 = vld [vmem:[%s2050 + $0x28] sm:$0xff]
        %v2057 = vld [vmem:[%s2050 + $0x30] sm:$0xff]
        %v2058 = vld [vmem:[%s2050 + $0x38] sm:$0xff]
        %2060 = vset.pattern.permute.xlu0 0
        %2061 = vperm.xlu0 %2060, %v2051
        %v2062 = vpop.permute.xlu0 %2061
        %2065 = vset.pattern.permute.xlu0 0
        %2066 = vperm.xlu0 %2065, %v2052
        %v2067 = vpop.permute.xlu0 %2066
        %2070 = vset.pattern.permute.xlu0 0
        %2071 = vperm.xlu0 %2070, %v2053
        %v2072 = vpop.permute.xlu0 %2071
        %2075 = vset.pattern.permute.xlu0 0
        %2076 = vperm.xlu0 %2075, %v2054
        %v2077 = vpop.permute.xlu0 %2076
        %2080 = vset.pattern.permute.xlu0 0
        %2081 = vperm.xlu0 %2080, %v2055
        %v2082 = vpop.permute.xlu0 %2081
        %2085 = vset.pattern.permute.xlu0 0
        %2086 = vperm.xlu0 %2085, %v2056
        %v2087 = vpop.permute.xlu0 %2086
        %2090 = vset.pattern.permute.xlu0 0
        %2091 = vperm.xlu0 %2090, %v2057
        %v2092 = vpop.permute.xlu0 %2091
        %2095 = vset.pattern.permute.xlu0 0
        %2096 = vperm.xlu0 %2095, %v2058
        %v2097 = vpop.permute.xlu0 %2096
        %v2107 = vunpack.c.l.b16 %v2042
        %v2108 = vunpack.c.h.b16 %v2042
        %v2109 = vunpack.c.l.b16 %v2043
        %v2110 = vunpack.c.h.b16 %v2043
        %v2111 = vunpack.c.l.b16 %v2044
        %v2112 = vunpack.c.h.b16 %v2044
        %v2113 = vunpack.c.l.b16 %v2045
        %v2114 = vunpack.c.h.b16 %v2045
        %v2115 = vunpack.c.l.b16 %v2046
        %v2116 = vunpack.c.h.b16 %v2046
        %v2117 = vunpack.c.l.b16 %v2047
        %v2118 = vunpack.c.h.b16 %v2047
        %v2119 = vunpack.c.l.b16 %v2048
        %v2120 = vunpack.c.h.b16 %v2048
        %v2121 = vunpack.c.l.b16 %v2049
        %v2122 = vunpack.c.h.b16 %v2049
        %v2123 = vpack.c.b16 %v2109, %v2107
        %v2124 = vpack.c.b16 %v2110, %v2108
        %v2125 = vpack.c.b16 %v2113, %v2111
        %v2126 = vpack.c.b16 %v2114, %v2112
        %v2127 = vpack.c.b16 %v2117, %v2115
        %v2128 = vpack.c.b16 %v2118, %v2116
        %v2129 = vpack.c.b16 %v2121, %v2119
        %v2130 = vpack.c.b16 %v2122, %v2120
        %2139 = vmatprep.subr.bf16.mxu0 %v1447
        %2140 = vmatpush1.bf16.xpose.msra.mxu0 %v1446
        %2141 = vmatprep.subr.bf16.mxu0 %v1451
        %2142 = vmatpush1.bf16.xpose.msra.mxu0 %v1450
        %2143 = vmatprep.subr.bf16.mxu0 %v1455
        %2144 = vmatpush1.bf16.xpose.msra.mxu0 %v1454
        %2145 = vmatprep.subr.bf16.mxu0 %v1459
        %2146 = vmatpush1.bf16.xpose.msra.mxu0 %v1458
        %2147 = vmatprep.subr.bf16.mxu0 %v1463
        %2148 = vmatpush1.bf16.xpose.msra.mxu0 %v1462
        %2149 = vmatprep.subr.bf16.mxu0 %v1467
        %2150 = vmatpush1.bf16.xpose.msra.mxu0 %v1466
        %2151 = vmatprep.subr.bf16.mxu0 %v1471
        %2152 = vmatpush1.bf16.xpose.msra.mxu0 %v1470
        %2153 = vmatprep.subr.bf16.mxu0 %v1475
        %2154 = vmatpush1.bf16.xpose.msra.mxu0 %v1474
        %2155 = vmatprep.subr.bf16.mxu0 0
        %2156 = vmatpush1.bf16.xpose.msra.mxu0 0
        %2157 = vmatprep.subr.bf16.mxu0 0
        %2158 = vmatpush1.bf16.xpose.msra.mxu0 0
        %2159 = vmatprep.subr.bf16.mxu0 0
        %2160 = vmatpush1.bf16.xpose.msra.mxu0 0
        %2161 = vmatprep.subr.bf16.mxu0 0
        %2162 = vmatpush1.bf16.xpose.msra.mxu0 0
        %2163 = vmatprep.subr.bf16.mxu0 0
        %2164 = vmatpush1.bf16.xpose.msra.mxu0 0
        %2165 = vmatprep.subr.bf16.mxu0 0
        %2166 = vmatpush1.bf16.xpose.msra.mxu0 0
        %2167 = vmatprep.subr.bf16.mxu0 0
        %2168 = vmatpush1.bf16.xpose.msra.mxu0 0
        %2169 = vmatprep.subr.bf16.mxu0 0
        %2170 = vmatpush1.bf16.xpose.msra.mxu0 0
        %2171 = vmatprep.mubr.bf16.mxu0 %v2124
        %2172 = vmatmul.mubr.bf16.gmra.mrb[0].mxu0 %v2123
        %v2173 = vpop.f32.mrb[0].mxu0
        %v2174 = vadd.f32 %v2062, %v2173
        %v2175 = vpop.f32.mrb[0].mxu0
        %v2176 = vpop.f32.mrb[0].mxu0
        %v2177 = vadd.f32 %v2067, %v2176
        %v2178 = vpop.f32.mrb[0].mxu0
        %2179 = vmatprep.mubr.bf16.mxu0 %v2126
        %2180 = vmatmul.mubr.bf16.gmra.mrb[0].mxu0 %v2125
        %v2181 = vpop.f32.mrb[0].mxu0
        %v2182 = vadd.f32 %v2072, %v2181
        %v2183 = vpop.f32.mrb[0].mxu0
        %v2184 = vpop.f32.mrb[0].mxu0
        %v2185 = vadd.f32 %v2077, %v2184
        %v2186 = vpop.f32.mrb[0].mxu0
        %2187 = vmatprep.mubr.bf16.mxu0 %v2128
        %2188 = vmatmul.mubr.bf16.gmra.mrb[0].mxu0 %v2127
        %v2189 = vpop.f32.mrb[0].mxu0
        %v2190 = vadd.f32 %v2082, %v2189
        %v2191 = vpop.f32.mrb[0].mxu0
        %v2192 = vpop.f32.mrb[0].mxu0
        %v2193 = vadd.f32 %v2087, %v2192
        %v2194 = vpop.f32.mrb[0].mxu0
        %2195 = vmatprep.mubr.bf16.mxu0 %v2130
        %2196 = vmatmul.mubr.bf16.gmra.mrb[0].mxu0 %v2129
        %v2197 = vpop.f32.mrb[0].mxu0
        %v2198 = vadd.f32 %v2092, %v2197
        %v2199 = vpop.f32.mrb[0].mxu0
        %v2200 = vpop.f32.mrb[0].mxu0
        %v2201 = vadd.f32 %v2097, %v2200
        %v2202 = vpop.f32.mrb[0].mxu0
        %2203 = vdwg.mxu0
        %v2204 = vpack.c.bf16 %v2014, %v2011
        %v2205 = vpack.c.bf16 %v2022, %v2019
        %v2206 = vpack.c.bf16 %v2030, %v2027
        %v2207 = vpack.c.bf16 %v2038, %v2035
        %v2212 = vunpack.c.l.b16 %v2204
        %v2213 = vunpack.c.h.b16 %v2204
        %v2214 = vunpack.c.l.b16 %v2205
        %v2215 = vunpack.c.h.b16 %v2205
        %v2216 = vunpack.c.l.b16 %v2206
        %v2217 = vunpack.c.h.b16 %v2206
        %v2218 = vunpack.c.l.b16 %v2207
        %v2219 = vunpack.c.h.b16 %v2207
        %v2220 = vpack.c.b16 %v2212, %v2212
        %v2221 = vpack.c.b16 %v2213, %v2213
        %v2222 = vpack.c.b16 %v2214, %v2214
        %v2223 = vpack.c.b16 %v2215, %v2215
        %v2224 = vpack.c.b16 %v2216, %v2216
        %v2225 = vpack.c.b16 %v2217, %v2217
        %v2226 = vpack.c.b16 %v2218, %v2218
        %v2227 = vpack.c.b16 %v2219, %v2219
        %s2236 = scalar_lea.vmem %s410, 32 [#allocation8]
        %2237 = vst [vmem:[%s2236] sm:$0xf] %v2220
        %2238 = vst [vmem:[%s2236 + $0x4] sm:$0xf] %v2221
        %2239 = vst [vmem:[%s2236 + $0x8] sm:$0xf] %v2222
        %2240 = vst [vmem:[%s2236 + $0xc] sm:$0xf] %v2223
        %2241 = vst [vmem:[%s2236 + $0x10] sm:$0xf] %v2224
        %2242 = vst [vmem:[%s2236 + $0x14] sm:$0xf] %v2225
        %2243 = vst [vmem:[%s2236 + $0x18] sm:$0xf] %v2226
        %2244 = vst [vmem:[%s2236 + $0x1c] sm:$0xf] %v2227
        %v2245 = vpack.c.bf16 %v2177, %v2174
        %v2246 = vpack.c.bf16 %v2185, %v2182
        %v2247 = vpack.c.bf16 %v2193, %v2190
        %v2248 = vpack.c.bf16 %v2201, %v2198
        %v2253 = vunpack.c.l.b16 %v2245
        %v2254 = vunpack.c.h.b16 %v2245
        %v2255 = vunpack.c.l.b16 %v2246
        %v2256 = vunpack.c.h.b16 %v2246
        %v2257 = vunpack.c.l.b16 %v2247
        %v2258 = vunpack.c.h.b16 %v2247
        %v2259 = vunpack.c.l.b16 %v2248
        %v2260 = vunpack.c.h.b16 %v2248
        %v2261 = vpack.c.b16 %v2253, %v2253
        %v2262 = vpack.c.b16 %v2254, %v2254
        %v2263 = vpack.c.b16 %v2255, %v2255
        %v2264 = vpack.c.b16 %v2256, %v2256
        %v2265 = vpack.c.b16 %v2257, %v2257
        %v2266 = vpack.c.b16 %v2258, %v2258
        %v2267 = vpack.c.b16 %v2259, %v2259
        %v2268 = vpack.c.b16 %v2260, %v2260
        %s2277 = scalar_lea.vmem %s417, 32 [#allocation9]
        %2278 = vst [vmem:[%s2277] sm:$0xf] %v2261
        %2279 = vst [vmem:[%s2277 + $0x4] sm:$0xf] %v2262
        %2280 = vst [vmem:[%s2277 + $0x8] sm:$0xf] %v2263
        %2281 = vst [vmem:[%s2277 + $0xc] sm:$0xf] %v2264
        %2282 = vst [vmem:[%s2277 + $0x10] sm:$0xf] %v2265
        %2283 = vst [vmem:[%s2277 + $0x14] sm:$0xf] %v2266
        %2284 = vst [vmem:[%s2277 + $0x18] sm:$0xf] %v2267
        %2285 = vst [vmem:[%s2277 + $0x1c] sm:$0xf] %v2268
        %s2286 = sand.u32 %s234, 1
        %s2287 = scalar_lea.sflag [#allocation4], %s2286
        %s2288 = sand.u32 %s234, 1
        %s2289 = smul.addr %s2288, 64
        %s2290 = scalar_lea.vmem [#allocation8], %s2289
        %s2291 = sand.u32 %s260, 1
        %s2292 = scalar_lea.sflag [#allocation10], %s2291
        %s2293 = sand.u32 %s260, 1
        %s2294 = smul.addr %s2293, 64
        %s2295 = scalar_lea.vmem [#allocation9], %s2294
        // Predicated region
        $region69: #{tpu_custom_call.1} parent=55 // pred_check
          %p2296 = pneg %p244
        $region70: #{tpu_custom_call.1} parent=55 // pred_check_branch
          %2298 = sbr.rel (%p2296) target = $region72
        $region71: #{tpu_custom_call.1} parent=55 // pred_region
          %s2300 = ssub.s32 1024, 1024
          %2301 = vsyncadd %s2287, %s2300
          %s2302 = smul.addr %s32, 16
          %s2303 = smul.addr %s2302, 64
          %s2304 = scalar_lea.hbm %s9, %s2303
          %s2305 = sshll.u32 %s2290, 4
          %s2306 = int_to_ptr.vmem [resolvable:$true] %s2305
          %2311 = dma.vmem_to_hbm [thread:$0]  %s2306, 1024, %s2304, %s2287, 64, 64, 4
        $region72: #{tpu_custom_call.1} parent=55 // pred_fallthru
          _
        // Predicated region
        $region73: #{tpu_custom_call.1} parent=55 // pred_check
          %p2312 = pneg %p270
        $region74: #{tpu_custom_call.1} parent=55 // pred_check_branch
          %2314 = sbr.rel (%p2312) target = $region76
        $region75: #{tpu_custom_call.1} parent=55 // pred_region
          %s2316 = ssub.s32 1024, 1024
          %2317 = vsyncadd %s2292, %s2316
          %s2318 = smul.addr %s32, 16
          %s2319 = smul.addr %s2318, 64
          %s2320 = scalar_lea.hbm %s10, %s2319
          %s2321 = sshll.u32 %s2295, 4
          %s2322 = int_to_ptr.vmem [resolvable:$true] %s2321
          %2327 = dma.vmem_to_hbm [thread:$0]  %s2322, 1024, %s2320, %s2292, 64, 64, 4
        $region76: #{tpu_custom_call.1} parent=55 // pred_fallthru
          _
      $region56: #{tpu_custom_call.1} parent=5 // pred_fallthru
        _
      %p2328 = scmp.le.s32.totalorder 2, %s27
      // Predicated region
      $region77: #{tpu_custom_call.1} parent=5 // pred_check
        %p2329 = pneg %p2328
      $region78: #{tpu_custom_call.1} parent=5 // pred_check_branch
        %2331 = sbr.rel (%p2329) target = $region80
      $region79: #{tpu_custom_call.1} parent=5 // pred_region
        %s2332 = ssub.s32 %s27, 2
        // Predicated region
        $region81: #{tpu_custom_call.1} parent=79 // pred_check
          %p2333 = pneg %p250
        $region82: #{tpu_custom_call.1} parent=79 // pred_check_branch
          %2335 = sbr.rel (%p2333) target = $region84
        $region83: #{tpu_custom_call.1} parent=79 // pred_region
          %s2336 = sand.u32 %s235, 1
          %s2337 = scalar_lea.sflag [#allocation4], %s2336
          %s2338 = sand.u32 %s235, 1
          %s2339 = smul.addr %s2338, 64
          %s2340 = scalar_lea.vmem [#allocation8], %s2339
          %2341 = dma.done %s2337, 1024
        $region84: #{tpu_custom_call.1} parent=79 // pred_fallthru
          _
        // Predicated region
        $region85: #{tpu_custom_call.1} parent=79 // pred_check
          %p2342 = pneg %p276
        $region86: #{tpu_custom_call.1} parent=79 // pred_check_branch
          %2344 = sbr.rel (%p2342) target = $region88
        $region87: #{tpu_custom_call.1} parent=79 // pred_region
          %s2345 = sand.u32 %s261, 1
          %s2346 = scalar_lea.sflag [#allocation10], %s2345
          %s2347 = sand.u32 %s261, 1
          %s2348 = smul.addr %s2347, 64
          %s2349 = scalar_lea.vmem [#allocation9], %s2348
          %2350 = dma.done %s2346, 1024
        $region88: #{tpu_custom_call.1} parent=79 // pred_fallthru
          _
      $region80: #{tpu_custom_call.1} parent=5 // pred_fallthru
        _
    $region6: #{tpu_custom_call.1} parent=1 // loop_footer
      %s31 = sadd.s32 1, %s27
    $region7: #{tpu_custom_call.1} parent=1 // loop_footer_branch
      %26 = sbr.rel target = $region3
    $region8: #{tpu_custom_call.1} parent=1 // loop_exit
      _
    %2351 = vsyncpa [#allocation3], 1
    %s2352 = scalar_lea.sflag [#allocation3], 1
    %2353 = vsyncpa %s2352, 1
    %2354 = vsyncpa [#allocation6], 1
    %2355 = vsyncpa [#allocation4], 1
    %s2356 = scalar_lea.sflag [#allocation4], 1
    %2357 = vsyncpa %s2356, 1
    %2358 = vsyncpa [#allocation10], 1
    %s2359 = scalar_lea.sflag [#allocation10], 1
    %2360 = vsyncpa %s2359, 1

</llo_original>
